<compile_context>
chip_gen: v6e
topology: v6e:2x2x1
jax: 0.10.0
libtpu: 0.0.40
codegen_flags: <defaults>
</compile_context>

<pallas_src>
import functools

import jax
import jax.numpy as jnp
from jax.experimental import pallas as pl
from jax.experimental.pallas import tpu as pltpu

LANE = 128
_LN_EPS = 1e-5
_VMEM_LIMIT = 48 * 1024 * 1024  # headroom below v7x's 64 MiB physical VMEM


def _round_up(x, m):
    return (x + m - 1) // m * m


def _choose_tiles(n):
    """Row tile tm / contraction tile tk for the A_hat @ XW product."""
    if n <= 1024:
        tm, tk = 128, 128
    else:
        tm, tk = 256, 512          # MXU-shaped tiles on v6e/v7x
    n_pad = _round_up(n, max(tm, tk))
    return n_pad, tm, tk


def _pad2(a, rows, cols):
    return jnp.pad(a, ((0, rows - a.shape[0]), (0, cols - a.shape[1])))


# ----------------------------- Pallas kernels ------------------------------

def _xw_kernel(x_ref, w_ref, o_ref):
    """XW = X @ W, bf16 operands, f32 accumulation, bf16 output (fed to aggregation)."""
    o_ref[...] = jnp.dot(
        x_ref[...].astype(jnp.bfloat16),
        w_ref[...].astype(jnp.bfloat16),
        preferred_element_type=jnp.float32,
    ).astype(jnp.bfloat16)


def _agg_kernel(*refs, apply_ln, d_true, tk):
    """H[i] = sum_k A_hat[i,k] @ XW[k] ; + bias ; ReLU ; (masked LayerNorm)."""
    if apply_ln:
        a_ref, xw_ref, b_ref, g_ref, beta_ref, o_ref = refs
    else:
        a_ref, xw_ref, b_ref, o_ref = refs

    k = pl.program_id(1)

    @pl.when(k == 0)
    def _():
        o_ref[...] = jnp.zeros_like(o_ref)

    start = pl.multiple_of(k * tk, tk)
    o_ref[...] += jnp.dot(a_ref[...], xw_ref[pl.ds(start, tk), :],
                          preferred_element_type=jnp.float32)

    @pl.when(k == pl.num_programs(1) - 1)
    def _():
        h = jnp.maximum(o_ref[...] + b_ref[...], 0.0)   # bias + ReLU (f32)
        # F.dropout(p=0.25) in eval mode == identity
        if apply_ln:                                    # nn.LayerNorm(hidden_dim)
            lane = jax.lax.broadcasted_iota(jnp.int32, h.shape, 1)
            mask = lane < d_true                        # padded lanes excluded
            inv_d = 1.0 / d_true
            mean = jnp.sum(h, axis=-1, keepdims=True) * inv_d   # padded lanes are 0
            diff = h - mean
            var = jnp.sum(jnp.where(mask, diff * diff, 0.0),
                          axis=-1, keepdims=True) * inv_d
            h = diff * jax.lax.rsqrt(var + _LN_EPS) * g_ref[...] + beta_ref[...]
        o_ref[...] = h


def _head_kernel(x_ref, w1_ref, b1_ref, w2_ref, b2_ref, o_ref, *, d_out):
    """post_mp (Linear -> Dropout(eval) -> Linear) + masked log_softmax over true lanes."""
    h = jnp.dot(x_ref[...].astype(jnp.bfloat16), w1_ref[...],
                preferred_element_type=jnp.float32) + b1_ref[...]
    # Dropout(0.25) in eval mode == identity
    z = jnp.dot(h.astype(jnp.bfloat16), w2_ref[...],
                preferred_element_type=jnp.float32) + b2_ref[...]
    lane = jax.lax.broadcasted_iota(jnp.int32, z.shape, 1)
    mask = lane < d_out
    z_m = jnp.where(mask, z, -jnp.inf)
    m = jnp.max(z_m, axis=-1, keepdims=True)
    lse = jnp.log(jnp.sum(jnp.exp(z_m - m), axis=-1, keepdims=True))
    o_ref[...] = jnp.where(mask, z - m - lse, 0.0)


# ----------------------------- pallas_call wrappers -------------------------

def _xw(x_pad, w_pad, tm):
    n_pad, din = x_pad.shape
    d_out = w_pad.shape[1]
    return pl.pallas_call(
        _xw_kernel,
        out_shape=jax.ShapeDtypeStruct((n_pad, d_out), jnp.bfloat16),
        grid=(n_pad // tm,),
        in_specs=[pl.BlockSpec((tm, din), lambda i: (i, 0)),
                  pl.BlockSpec((din, d_out), lambda i: (0, 0))],
        out_specs=pl.BlockSpec((tm, d_out), lambda i: (i, 0)),
        compiler_params=pltpu.CompilerParams(
            dimension_semantics=("parallel",),
            vmem_limit_bytes=_VMEM_LIMIT),
    )(x_pad, w_pad)


def _gcn_aggregate(a_hat, xw, b, gamma, beta, *, apply_ln, d_true, tm, tk):
    n_pad = a_hat.shape[0]
    d_pad = xw.shape[1]
    kern = functools.partial(_agg_kernel, apply_ln=apply_ln, d_true=d_true, tk=tk)
    in_specs = [
        pl.BlockSpec((tm, tk), lambda i, k: (i, k)),         # A_hat tile (streamed)
        pl.BlockSpec((n_pad, d_pad), lambda i, k: (0, 0)),   # XW (VMEM-resident)
        pl.BlockSpec((1, d_pad), lambda i, k: (0, 0)),       # bias (loaded once)
    ]
    args = [a_hat, xw, b]
    if apply_ln:
        in_specs += [pl.BlockSpec((1, d_pad), lambda i, k: (0, 0)),
                     pl.BlockSpec((1, d_pad), lambda i, k: (0, 0))]
        args += [gamma, beta]
    cost = pl.CostEstimate(
        flops=2 * n_pad * n_pad * d_pad,
        transcendentals=0,
        bytes_accessed=a_hat.size * 2 + xw.size * 2 + n_pad * d_pad * 4)
    return pl.pallas_call(
        kern,
        out_shape=jax.ShapeDtypeStruct((n_pad, d_pad), jnp.float32),
        grid=(n_pad // tm, n_pad // tk),
        in_specs=in_specs,
        out_specs=pl.BlockSpec((tm, d_pad), lambda i, k: (i, 0)),
        compiler_params=pltpu.CompilerParams(
            dimension_semantics=("parallel", "arbitrary"),
            vmem_limit_bytes=_VMEM_LIMIT),
        cost_estimate=cost,
    )(*args)


def _head(h_pad, w1, b1, w2, b2, *, d_out, tm):
    n_pad, d_pad = h_pad.shape
    out_pad = w2.shape[1]
    kern = functools.partial(_head_kernel, d_out=d_out)
    return pl.pallas_call(
        kern,
        out_shape=jax.ShapeDtypeStruct((n_pad, out_pad), jnp.float32),
        grid=(n_pad // tm,),
        in_specs=[pl.BlockSpec((tm, d_pad), lambda i: (i, 0)),
                  pl.BlockSpec((d_pad, d_pad), lambda i: (0, 0)),
                  pl.BlockSpec((1, d_pad), lambda i: (0, 0)),
                  pl.BlockSpec((d_pad, out_pad), lambda i: (0, 0)),
                  pl.BlockSpec((1, out_pad), lambda i: (0, 0))],
        out_specs=pl.BlockSpec((tm, out_pad), lambda i: (i, 0)),
        compiler_params=pltpu.CompilerParams(
            dimension_semantics=("parallel",),
            vmem_limit_bytes=_VMEM_LIMIT),
    )(h_pad, w1, b1, w2, b2)


# ------------------------------- glue (JAX) --------------------------------

def build_a_hat(edge_index, num_nodes):
    """Dense GCN-normalized adjacency: D^{-1/2} (A + I) D^{-1/2},
    A[target, source] = 1 per edge (PyG source_to_target flow, add_self_loops)."""
    src = edge_index[0]
    dst = edge_index[1]
    a = jnp.zeros((num_nodes, num_nodes), jnp.float32)
    a = a.at[dst, src].add(1.0)
    a = a + jnp.eye(num_nodes, dtype=jnp.float32)          # self loops
    deg = jnp.sum(a, axis=1)                               # in-degree incl. self loop
    dinv = jnp.where(deg > 0, jax.lax.rsqrt(deg), 0.0)
    return dinv[:, None] * a * dinv[None, :]


def init_params(key, input_dim, hidden_dim, output_dim):
    ks = jax.random.split(key, 8)
    p = {}
    # GCNConv layers: weight (in, out), bias (out,) — bias init zeros in PyG
    dims = [(input_dim, hidden_dim), (hidden_dim, hidden_dim), (hidden_dim, hidden_dim)]
    for i, (din, dout) in enumerate(dims):
        scale = (6.0 / (din + dout)) ** 0.5                # glorot
        p[f"conv{i}_w"] = jax.random.uniform(ks[i], (din, dout), jnp.float32,
                                             -scale, scale)
        p[f"conv{i}_b"] = jnp.zeros((1, dout), jnp.float32)
    # two LayerNorms (gamma=1, beta=0)
    for i in range(2):
        p[f"ln{i}_g"] = jnp.ones((1, hidden_dim), jnp.float32)
        p[f"ln{i}_b"] = jnp.zeros((1, hidden_dim), jnp.float32)
    # post_mp: Linear(hidden, hidden), Linear(hidden, output)
    s1 = 1.0 / (hidden_dim ** 0.5)
    p["mp1_w"] = jax.random.uniform(ks[3], (hidden_dim, hidden_dim), jnp.float32, -s1, s1)
    p["mp1_b"] = jax.random.uniform(ks[4], (1, hidden_dim), jnp.float32, -s1, s1)
    p["mp2_w"] = jax.random.uniform(ks[5], (hidden_dim, output_dim), jnp.float32, -s1, s1)
    p["mp2_b"] = jax.random.uniform(ks[6], (1, output_dim), jnp.float32, -s1, s1)
    return p


@functools.partial(jax.jit, static_argnames=("hidden_dim", "output_dim"))
def gnn_stack_forward(params, x, edge_index, batch, *, hidden_dim, output_dim):
    """Forward pass of GNNStack(task='node') in eval mode."""
    del batch  # only used for task='graph' global_mean_pool
    n, input_dim = x.shape
    n_pad, tm, tk = _choose_tiles(n)

    a_hat = build_a_hat(edge_index, n)
    a_hat = _pad2(a_hat, n_pad, n_pad).astype(jnp.bfloat16)

    in_pad = _round_up(input_dim, LANE)
    d_pad = _round_up(hidden_dim, LANE)
    out_pad = _round_up(output_dim, LANE)

    h = _pad2(x.astype(jnp.float32), n_pad, in_pad)
    num_layers = 3
    for i in range(num_layers):
        w = _pad2(params[f"conv{i}_w"], h.shape[1], d_pad)
        b = _pad2(params[f"conv{i}_b"], 1, d_pad)
        xw = _xw(h, w, tm)                       # X @ W computed once per layer
        apply_ln = i != num_layers - 1
        if apply_ln:
            g = _pad2(params[f"ln{i}_g"], 1, d_pad)
            beta = _pad2(params[f"ln{i}_b"], 1, d_pad)
        else:
            g = beta = None                      # last layer: no LN params loaded
        h = _gcn_aggregate(a_hat, xw, b, g, beta,
                           apply_ln=apply_ln, d_true=hidden_dim, tm=tm, tk=tk)

    w1 = _pad2(params["mp1_w"], d_pad, d_pad).astype(jnp.bfloat16)
    b1 = _pad2(params["mp1_b"], 1, d_pad)
    w2 = _pad2(params["mp2_w"], d_pad, out_pad).astype(jnp.bfloat16)
    b2 = _pad2(params["mp2_b"], 1, out_pad)
    logits = _head(h, w1, b1, w2, b2, d_out=output_dim, tm=tm)
    return logits[:n, :output_dim]


# ---------------------------------- main ------------------------------------

if __name__ == "__main__":
    INPUT_DIM, HIDDEN_DIM, OUTPUT_DIM = 4, 32, 8
    N_NODES, N_EDGES = 16, 32

    key = jax.random.PRNGKey(0)
    k_x, k_e, k_p = jax.random.split(key, 3)

    x = jax.random.normal(k_x, (N_NODES, INPUT_DIM), jnp.float32)
    edge_index = jax.random.randint(k_e, (2, N_EDGES), 0, N_NODES, jnp.int32)
    batch = jnp.zeros((N_NODES,), jnp.int32)

    params = init_params(k_p, INPUT_DIM, HIDDEN_DIM, OUTPUT_DIM)

    out = gnn_stack_forward(params, x, edge_index, batch,
                            hidden_dim=HIDDEN_DIM, output_dim=OUTPUT_DIM)
    out = jax.block_until_ready(out)

    assert out.shape == (N_NODES, OUTPUT_DIM)
    # rows of log_softmax must sum (in prob space) to 1
    assert bool(jnp.allclose(jnp.sum(jnp.exp(out), axis=1), 1.0, atol=1e-4))
    print("KERNEL_OK")
</pallas_src>

<mosaic_0001>
module attributes {stable_mosaic.version = 11 : i64} {
  func.func private @main(%arg0: i32) attributes {dimension_semantics = [#tpu.dimension_semantics<core_parallel>], iteration_bounds = array<i64: 2>, tpu.core_type = #tpu.core_type<sc_scalar_subcore>, window_params = []} {
    return
  }
}

module attributes {stable_mosaic.version = 11 : i64} {
  func.func private @main(%arg0: i32) attributes {dimension_semantics = [#tpu.dimension_semantics<core_parallel>], iteration_bounds = array<i64: 2>, tpu.core_type = #tpu.core_type<sc_scalar_subcore>, window_params = []} {
    return
  }
}

module attributes {stable_mosaic.version = 11 : i64} {
  func.func @_agg_kernel(%arg0: i32, %arg1: i32, %arg2: memref<128x128xbf16, #tpu.memory_space<vmem>>, %arg3: memref<128x128xbf16, #tpu.memory_space<vmem>>, %arg4: memref<1x128xf32, #tpu.memory_space<vmem>>, %arg5: memref<128x128xf32, #tpu.memory_space<vmem>>) attributes {dimension_semantics = [#tpu.dimension_semantics<parallel>, #tpu.dimension_semantics<arbitrary>], iteration_bounds = array<i64: 1, 1>, scalar_prefetch = 0 : i64, scratch_operands = 0 : i64, tpu.core_type = #tpu.core_type<tc>, window_params = [{transform_indices = @transform_0, window_bounds = array<i64: 128, 128>}, {pipeline_mode = #tpu.pipeline_mode<synchronous>, transform_indices = @transform_1, window_bounds = array<i64: 128, 128>}, {pipeline_mode = #tpu.pipeline_mode<synchronous>, transform_indices = @transform_2, window_bounds = array<i64: 1, 128>}, {transform_indices = @transform_3, window_bounds = array<i64: 128, 128>}]} {
    %c0_i32 = arith.constant 0 : i32
    %0 = arith.cmpi eq, %arg1, %c0_i32 : i32
    %1 = arith.extui %0 : i1 to i32
    %c0_i32_0 = arith.constant 0 : i32
    %2 = arith.cmpi ne, %1, %c0_i32_0 : i32
    scf.if %2 {
      %cst_9 = arith.constant 0.000000e+00 : f32
      %15 = vector.broadcast %cst_9 : f32 to vector<128x128xf32>
      %c0_10 = arith.constant 0 : index
      %c0_11 = arith.constant 0 : index
      %16 = vector.load %arg5[%c0_10, %c0_11] : memref<128x128xf32, #tpu.memory_space<vmem>>, vector<128x128xf32>
      tpu.vector_store %arg5[%c0_10, %c0_11], %15 {strides = array<i32>} : memref<128x128xf32, #tpu.memory_space<vmem>>, vector<128x128xf32>,
    } else {
    }
    %c128_i32 = arith.constant 128 : i32
    %3 = arith.muli %arg1, %c128_i32 : i32
    %4 = tpu.assume_multiple %3, 128 : i32
    %c0 = arith.constant 0 : index
    %c0_1 = arith.constant 0 : index
    %5 = vector.load %arg5[%c0, %c0_1] : memref<128x128xf32, #tpu.memory_space<vmem>>, vector<128x128xf32>
    %c0_2 = arith.constant 0 : index
    %c0_3 = arith.constant 0 : index
    %6 = vector.load %arg2[%c0_2, %c0_3] : memref<128x128xbf16, #tpu.memory_space<vmem>>, vector<128x128xbf16>
    %7 = arith.index_cast %4 : i32 to index
    %c0_4 = arith.constant 0 : index
    %8 = vector.load %arg3[%7, %c0_4] : memref<128x128xbf16, #tpu.memory_space<vmem>>, vector<128x128xbf16>
    %cst = arith.constant dense<0.000000e+00> : vector<128x128xf32>
    %9 = tpu.matmul %6, %8, %cst {dimension_numbers = #tpu.dot_dimension_numbers<[1], [0], [0], [1], [0, 0, 1, 1], [], []>} : vector<128x128xbf16>, vector<128x128xbf16>, vector<128x128xf32> -> vector<128x128xf32>
    %10 = arith.addf %5, %9 : vector<128x128xf32>
    %c0_5 = arith.constant 0 : index
    %c0_6 = arith.constant 0 : index
    %11 = vector.load %arg5[%c0_5, %c0_6] : memref<128x128xf32, #tpu.memory_space<vmem>>, vector<128x128xf32>
    tpu.vector_store %arg5[%c0_5, %c0_6], %10 {strides = array<i32>} : memref<128x128xf32, #tpu.memory_space<vmem>>, vector<128x128xf32>,
    %c0_i32_7 = arith.constant 0 : i32
    %12 = arith.cmpi eq, %arg1, %c0_i32_7 : i32
    %13 = arith.extui %12 : i1 to i32
    %c0_i32_8 = arith.constant 0 : i32
    %14 = arith.cmpi ne, %13, %c0_i32_8 : i32
    scf.if %14 {
      %c0_9 = arith.constant 0 : index
      %c0_10 = arith.constant 0 : index
      %15 = vector.load %arg5[%c0_9, %c0_10] : memref<128x128xf32, #tpu.memory_space<vmem>>, vector<128x128xf32>
      %c0_11 = arith.constant 0 : index
      %c0_12 = arith.constant 0 : index
      %16 = vector.load %arg4[%c0_11, %c0_12] : memref<1x128xf32, #tpu.memory_space<vmem>>, vector<1x128xf32>
      %17 = vector.broadcast %16 : vector<1x128xf32> to vector<128x128xf32>
      %18 = arith.addf %15, %17 : vector<128x128xf32>
      %cst_13 = arith.constant 0.000000e+00 : f32
      %19 = vector.broadcast %cst_13 : f32 to vector<128x128xf32>
      %20 = arith.maximumf %18, %19 : vector<128x128xf32>
      %c0_14 = arith.constant 0 : index
      %c0_15 = arith.constant 0 : index
      %21 = vector.load %arg5[%c0_14, %c0_15] : memref<128x128xf32, #tpu.memory_space<vmem>>, vector<128x128xf32>
      tpu.vector_store %arg5[%c0_14, %c0_15], %20 {strides = array<i32>} : memref<128x128xf32, #tpu.memory_space<vmem>>, vector<128x128xf32>,
    } else {
    }
    return
  }
  func.func @transform_0(%arg0: i32, %arg1: i32) -> (i32, i32) {
    %c0_i32 = arith.constant 0 : i32
    return %arg0, %arg1 : i32, i32
  }
  func.func @transform_1(%arg0: i32, %arg1: i32) -> (i32, i32) {
    %c0_i32 = arith.constant 0 : i32
    %c0_i32_0 = arith.constant 0 : i32
    %c0_i32_1 = arith.constant 0 : i32
    return %c0_i32, %c0_i32_0 : i32, i32
  }
  func.func @transform_2(%arg0: i32, %arg1: i32) -> (i32, i32) {
    %c0_i32 = arith.constant 0 : i32
    %c0_i32_0 = arith.constant 0 : i32
    %c0_i32_1 = arith.constant 0 : i32
    return %c0_i32, %c0_i32_0 : i32, i32
  }
  func.func @transform_3(%arg0: i32, %arg1: i32) -> (i32, i32) {
    %c0_i32 = arith.constant 0 : i32
    %c0_i32_0 = arith.constant 0 : i32
    return %arg0, %c0_i32 : i32, i32
  }
}

module attributes {stable_mosaic.version = 11 : i64} {
  func.func @_xw_kernel(%arg0: i32, %arg1: memref<128x128xf32, #tpu.memory_space<vmem>>, %arg2: memref<128x128xf32, #tpu.memory_space<vmem>>, %arg3: memref<128x128xbf16, #tpu.memory_space<vmem>>) attributes {dimension_semantics = [#tpu.dimension_semantics<parallel>], iteration_bounds = array<i64: 1>, scalar_prefetch = 0 : i64, scratch_operands = 0 : i64, tpu.core_type = #tpu.core_type<tc>, window_params = [{transform_indices = @transform_0, window_bounds = array<i64: 128, 128>}, {pipeline_mode = #tpu.pipeline_mode<synchronous>, transform_indices = @transform_1, window_bounds = array<i64: 128, 128>}, {transform_indices = @transform_2, window_bounds = array<i64: 128, 128>}]} {
    %c0 = arith.constant 0 : index
    %c0_0 = arith.constant 0 : index
    %0 = vector.load %arg1[%c0, %c0_0] : memref<128x128xf32, #tpu.memory_space<vmem>>, vector<128x128xf32>
    %1 = arith.truncf %0 : vector<128x128xf32> to vector<128x128xbf16>
    %c0_1 = arith.constant 0 : index
    %c0_2 = arith.constant 0 : index
    %2 = vector.load %arg2[%c0_1, %c0_2] : memref<128x128xf32, #tpu.memory_space<vmem>>, vector<128x128xf32>
    %3 = arith.truncf %2 : vector<128x128xf32> to vector<128x128xbf16>
    %cst = arith.constant dense<0.000000e+00> : vector<128x128xf32>
    %4 = tpu.matmul %1, %3, %cst {dimension_numbers = #tpu.dot_dimension_numbers<[1], [0], [0], [1], [0, 0, 1, 1], [], []>} : vector<128x128xbf16>, vector<128x128xbf16>, vector<128x128xf32> -> vector<128x128xf32>
    %5 = arith.truncf %4 : vector<128x128xf32> to vector<128x128xbf16>
    %c0_3 = arith.constant 0 : index
    %c0_4 = arith.constant 0 : index
    %6 = vector.load %arg3[%c0_3, %c0_4] : memref<128x128xbf16, #tpu.memory_space<vmem>>, vector<128x128xbf16>
    tpu.vector_store %arg3[%c0_3, %c0_4], %5 {strides = array<i32>} : memref<128x128xbf16, #tpu.memory_space<vmem>>, vector<128x128xbf16>,
    return
  }
  func.func @transform_0(%arg0: i32) -> (i32, i32) {
    %c0_i32 = arith.constant 0 : i32
    %c0_i32_0 = arith.constant 0 : i32
    return %arg0, %c0_i32 : i32, i32
  }
  func.func @transform_1(%arg0: i32) -> (i32, i32) {
    %c0_i32 = arith.constant 0 : i32
    %c0_i32_0 = arith.constant 0 : i32
    %c0_i32_1 = arith.constant 0 : i32
    return %c0_i32, %c0_i32_0 : i32, i32
  }
  func.func @transform_2(%arg0: i32) -> (i32, i32) {
    %c0_i32 = arith.constant 0 : i32
    %c0_i32_0 = arith.constant 0 : i32
    return %arg0, %c0_i32 : i32, i32
  }
}

module attributes {stable_mosaic.version = 11 : i64} {
  func.func @_head_kernel(%arg0: i32, %arg1: memref<128x128xf32, #tpu.memory_space<vmem>>, %arg2: memref<128x128xbf16, #tpu.memory_space<vmem>>, %arg3: memref<1x128xf32, #tpu.memory_space<vmem>>, %arg4: memref<128x128xbf16, #tpu.memory_space<vmem>>, %arg5: memref<1x128xf32, #tpu.memory_space<vmem>>, %arg6: memref<128x128xf32, #tpu.memory_space<vmem>>) attributes {dimension_semantics = [#tpu.dimension_semantics<parallel>], iteration_bounds = array<i64: 1>, scalar_prefetch = 0 : i64, scratch_operands = 0 : i64, tpu.core_type = #tpu.core_type<tc>, window_params = [{transform_indices = @transform_0, window_bounds = array<i64: 128, 128>}, {pipeline_mode = #tpu.pipeline_mode<synchronous>, transform_indices = @transform_1, window_bounds = array<i64: 128, 128>}, {pipeline_mode = #tpu.pipeline_mode<synchronous>, transform_indices = @transform_2, window_bounds = array<i64: 1, 128>}, {pipeline_mode = #tpu.pipeline_mode<synchronous>, transform_indices = @transform_3, window_bounds = array<i64: 128, 128>}, {pipeline_mode = #tpu.pipeline_mode<synchronous>, transform_indices = @transform_4, window_bounds = array<i64: 1, 128>}, {transform_indices = @transform_5, window_bounds = array<i64: 128, 128>}]} {
    %c0 = arith.constant 0 : index
    %c0_0 = arith.constant 0 : index
    %0 = vector.load %arg1[%c0, %c0_0] : memref<128x128xf32, #tpu.memory_space<vmem>>, vector<128x128xf32>
    %1 = arith.truncf %0 : vector<128x128xf32> to vector<128x128xbf16>
    %c0_1 = arith.constant 0 : index
    %c0_2 = arith.constant 0 : index
    %2 = vector.load %arg2[%c0_1, %c0_2] : memref<128x128xbf16, #tpu.memory_space<vmem>>, vector<128x128xbf16>
    %cst = arith.constant dense<0.000000e+00> : vector<128x128xf32>
    %3 = tpu.matmul %1, %2, %cst {dimension_numbers = #tpu.dot_dimension_numbers<[1], [0], [0], [1], [0, 0, 1, 1], [], []>} : vector<128x128xbf16>, vector<128x128xbf16>, vector<128x128xf32> -> vector<128x128xf32>
    %c0_3 = arith.constant 0 : index
    %c0_4 = arith.constant 0 : index
    %4 = vector.load %arg3[%c0_3, %c0_4] : memref<1x128xf32, #tpu.memory_space<vmem>>, vector<1x128xf32>
    %5 = vector.broadcast %4 : vector<1x128xf32> to vector<128x128xf32>
    %6 = arith.addf %3, %5 : vector<128x128xf32>
    %7 = arith.truncf %6 : vector<128x128xf32> to vector<128x128xbf16>
    %c0_5 = arith.constant 0 : index
    %c0_6 = arith.constant 0 : index
    %8 = vector.load %arg4[%c0_5, %c0_6] : memref<128x128xbf16, #tpu.memory_space<vmem>>, vector<128x128xbf16>
    %cst_7 = arith.constant dense<0.000000e+00> : vector<128x128xf32>
    %9 = tpu.matmul %7, %8, %cst_7 {dimension_numbers = #tpu.dot_dimension_numbers<[1], [0], [0], [1], [0, 0, 1, 1], [], []>} : vector<128x128xbf16>, vector<128x128xbf16>, vector<128x128xf32> -> vector<128x128xf32>
    %c0_8 = arith.constant 0 : index
    %c0_9 = arith.constant 0 : index
    %10 = vector.load %arg5[%c0_8, %c0_9] : memref<1x128xf32, #tpu.memory_space<vmem>>, vector<1x128xf32>
    %11 = vector.broadcast %10 : vector<1x128xf32> to vector<128x128xf32>
    %12 = arith.addf %9, %11 : vector<128x128xf32>
    %13 = tpu.iota {dimensions = array<i32: 1>} : vector<128x128xi32>
    %c8_i32 = arith.constant 8 : i32
    %14 = vector.broadcast %c8_i32 : i32 to vector<128x128xi32>
    %15 = arith.cmpi slt, %13, %14 : vector<128x128xi32>
    %cst_10 = arith.constant 0xFF800000 : f32
    %16 = vector.broadcast %cst_10 : f32 to vector<128x128xf32>
    %17 = arith.select %15, %12, %16 : vector<128x128xi1>, vector<128x128xf32>
    %cst_11 = arith.constant dense<0xFF800000> : vector<128xf32>
    %18 = vector.multi_reduction <maximumf>, %17, %cst_11 [1] : vector<128x128xf32> to vector<128xf32>
    %19 = vector.shape_cast %18 : vector<128xf32> to vector<128x1xf32>
    %20 = vector.broadcast %19 : vector<128x1xf32> to vector<128x128xf32>
    %21 = arith.subf %17, %20 : vector<128x128xf32>
    %22 = math.exp %21 : vector<128x128xf32>
    %cst_12 = arith.constant dense<0.000000e+00> : vector<128xf32>
    %23 = vector.multi_reduction <add>, %22, %cst_12 [1] : vector<128x128xf32> to vector<128xf32>
    %24 = vector.shape_cast %23 : vector<128xf32> to vector<128x1xf32>
    %25 = math.log %24 : vector<128x1xf32>
    %26 = vector.broadcast %19 : vector<128x1xf32> to vector<128x128xf32>
    %27 = arith.subf %12, %26 : vector<128x128xf32>
    %28 = vector.broadcast %25 : vector<128x1xf32> to vector<128x128xf32>
    %29 = arith.subf %27, %28 : vector<128x128xf32>
    %cst_13 = arith.constant 0.000000e+00 : f32
    %30 = vector.broadcast %cst_13 : f32 to vector<128x128xf32>
    %31 = arith.select %15, %29, %30 : vector<128x128xi1>, vector<128x128xf32>
    %c0_14 = arith.constant 0 : index
    %c0_15 = arith.constant 0 : index
    %32 = vector.load %arg6[%c0_14, %c0_15] : memref<128x128xf32, #tpu.memory_space<vmem>>, vector<128x128xf32>
    tpu.vector_store %arg6[%c0_14, %c0_15], %31 {strides = array<i32>} : memref<128x128xf32, #tpu.memory_space<vmem>>, vector<128x128xf32>,
    return
  }
  func.func @transform_0(%arg0: i32) -> (i32, i32) {
    %c0_i32 = arith.constant 0 : i32
    %c0_i32_0 = arith.constant 0 : i32
    return %arg0, %c0_i32 : i32, i32
  }
  func.func @transform_1(%arg0: i32) -> (i32, i32) {
    %c0_i32 = arith.constant 0 : i32
    %c0_i32_0 = arith.constant 0 : i32
    %c0_i32_1 = arith.constant 0 : i32
    return %c0_i32, %c0_i32_0 : i32, i32
  }
  func.func @transform_2(%arg0: i32) -> (i32, i32) {
    %c0_i32 = arith.constant 0 : i32
    %c0_i32_0 = arith.constant 0 : i32
    %c0_i32_1 = arith.constant 0 : i32
    return %c0_i32, %c0_i32_0 : i32, i32
  }
  func.func @transform_3(%arg0: i32) -> (i32, i32) {
    %c0_i32 = arith.constant 0 : i32
    %c0_i32_0 = arith.constant 0 : i32
    %c0_i32_1 = arith.constant 0 : i32
    return %c0_i32, %c0_i32_0 : i32, i32
  }
  func.func @transform_4(%arg0: i32) -> (i32, i32) {
    %c0_i32 = arith.constant 0 : i32
    %c0_i32_0 = arith.constant 0 : i32
    %c0_i32_1 = arith.constant 0 : i32
    return %c0_i32, %c0_i32_0 : i32, i32
  }
  func.func @transform_5(%arg0: i32) -> (i32, i32) {
    %c0_i32 = arith.constant 0 : i32
    %c0_i32_0 = arith.constant 0 : i32
    return %arg0, %c0_i32 : i32, i32
  }
}

module attributes {stable_mosaic.version = 11 : i64} {
  func.func @_agg_kernel(%arg0: i32, %arg1: i32, %arg2: memref<128x128xbf16, #tpu.memory_space<vmem>>, %arg3: memref<128x128xbf16, #tpu.memory_space<vmem>>, %arg4: memref<1x128xf32, #tpu.memory_space<vmem>>, %arg5: memref<1x128xf32, #tpu.memory_space<vmem>>, %arg6: memref<1x128xf32, #tpu.memory_space<vmem>>, %arg7: memref<128x128xf32, #tpu.memory_space<vmem>>) attributes {dimension_semantics = [#tpu.dimension_semantics<parallel>, #tpu.dimension_semantics<arbitrary>], iteration_bounds = array<i64: 1, 1>, scalar_prefetch = 0 : i64, scratch_operands = 0 : i64, tpu.core_type = #tpu.core_type<tc>, window_params = [{transform_indices = @transform_0, window_bounds = array<i64: 128, 128>}, {pipeline_mode = #tpu.pipeline_mode<synchronous>, transform_indices = @transform_1, window_bounds = array<i64: 128, 128>}, {pipeline_mode = #tpu.pipeline_mode<synchronous>, transform_indices = @transform_2, window_bounds = array<i64: 1, 128>}, {pipeline_mode = #tpu.pipeline_mode<synchronous>, transform_indices = @transform_3, window_bounds = array<i64: 1, 128>}, {pipeline_mode = #tpu.pipeline_mode<synchronous>, transform_indices = @transform_4, window_bounds = array<i64: 1, 128>}, {transform_indices = @transform_5, window_bounds = array<i64: 128, 128>}]} {
    %c0_i32 = arith.constant 0 : i32
    %0 = arith.cmpi eq, %arg1, %c0_i32 : i32
    %1 = arith.extui %0 : i1 to i32
    %c0_i32_0 = arith.constant 0 : i32
    %2 = arith.cmpi ne, %1, %c0_i32_0 : i32
    scf.if %2 {
      %cst_9 = arith.constant 0.000000e+00 : f32
      %15 = vector.broadcast %cst_9 : f32 to vector<128x128xf32>
      %c0_10 = arith.constant 0 : index
      %c0_11 = arith.constant 0 : index
      %16 = vector.load %arg7[%c0_10, %c0_11] : memref<128x128xf32, #tpu.memory_space<vmem>>, vector<128x128xf32>
      tpu.vector_store %arg7[%c0_10, %c0_11], %15 {strides = array<i32>} : memref<128x128xf32, #tpu.memory_space<vmem>>, vector<128x128xf32>,
    } else {
    }
    %c128_i32 = arith.constant 128 : i32
    %3 = arith.muli %arg1, %c128_i32 : i32
    %4 = tpu.assume_multiple %3, 128 : i32
    %c0 = arith.constant 0 : index
    %c0_1 = arith.constant 0 : index
    %5 = vector.load %arg7[%c0, %c0_1] : memref<128x128xf32, #tpu.memory_space<vmem>>, vector<128x128xf32>
    %c0_2 = arith.constant 0 : index
    %c0_3 = arith.constant 0 : index
    %6 = vector.load %arg2[%c0_2, %c0_3] : memref<128x128xbf16, #tpu.memory_space<vmem>>, vector<128x128xbf16>
    %7 = arith.index_cast %4 : i32 to index
    %c0_4 = arith.constant 0 : index
    %8 = vector.load %arg3[%7, %c0_4] : memref<128x128xbf16, #tpu.memory_space<vmem>>, vector<128x128xbf16>
    %cst = arith.constant dense<0.000000e+00> : vector<128x128xf32>
    %9 = tpu.matmul %6, %8, %cst {dimension_numbers = #tpu.dot_dimension_numbers<[1], [0], [0], [1], [0, 0, 1, 1], [], []>} : vector<128x128xbf16>, vector<128x128xbf16>, vector<128x128xf32> -> vector<128x128xf32>
    %10 = arith.addf %5, %9 : vector<128x128xf32>
    %c0_5 = arith.constant 0 : index
    %c0_6 = arith.constant 0 : index
    %11 = vector.load %arg7[%c0_5, %c0_6] : memref<128x128xf32, #tpu.memory_space<vmem>>, vector<128x128xf32>
    tpu.vector_store %arg7[%c0_5, %c0_6], %10 {strides = array<i32>} : memref<128x128xf32, #tpu.memory_space<vmem>>, vector<128x128xf32>,
    %c0_i32_7 = arith.constant 0 : i32
    %12 = arith.cmpi eq, %arg1, %c0_i32_7 : i32
    %13 = arith.extui %12 : i1 to i32
    %c0_i32_8 = arith.constant 0 : i32
    %14 = arith.cmpi ne, %13, %c0_i32_8 : i32
    scf.if %14 {
      %c0_9 = arith.constant 0 : index
      %c0_10 = arith.constant 0 : index
      %15 = vector.load %arg7[%c0_9, %c0_10] : memref<128x128xf32, #tpu.memory_space<vmem>>, vector<128x128xf32>
      %c0_11 = arith.constant 0 : index
      %c0_12 = arith.constant 0 : index
      %16 = vector.load %arg4[%c0_11, %c0_12] : memref<1x128xf32, #tpu.memory_space<vmem>>, vector<1x128xf32>
      %17 = vector.broadcast %16 : vector<1x128xf32> to vector<128x128xf32>
      %18 = arith.addf %15, %17 : vector<128x128xf32>
      %cst_13 = arith.constant 0.000000e+00 : f32
      %19 = vector.broadcast %cst_13 : f32 to vector<128x128xf32>
      %20 = arith.maximumf %18, %19 : vector<128x128xf32>
      %21 = tpu.iota {dimensions = array<i32: 1>} : vector<128x128xi32>
      %c32_i32 = arith.constant 32 : i32
      %22 = vector.broadcast %c32_i32 : i32 to vector<128x128xi32>
      %23 = arith.cmpi slt, %21, %22 : vector<128x128xi32>
      %cst_14 = arith.constant dense<0.000000e+00> : vector<128xf32>
      %24 = vector.multi_reduction <add>, %20, %cst_14 [1] : vector<128x128xf32> to vector<128xf32>
      %25 = vector.shape_cast %24 : vector<128xf32> to vector<128x1xf32>
      %cst_15 = arith.constant 3.125000e-02 : f32
      %26 = vector.broadcast %cst_15 : f32 to vector<128x1xf32>
      %27 = arith.mulf %25, %26 : vector<128x1xf32>
      %28 = vector.broadcast %27 : vector<128x1xf32> to vector<128x128xf32>
      %29 = arith.subf %20, %28 : vector<128x128xf32>
      %30 = arith.mulf %29, %29 : vector<128x128xf32>
      %cst_16 = arith.constant 0.000000e+00 : f32
      %31 = vector.broadcast %cst_16 : f32 to vector<128x128xf32>
      %32 = arith.select %23, %30, %31 : vector<128x128xi1>, vector<128x128xf32>
      %cst_17 = arith.constant dense<0.000000e+00> : vector<128xf32>
      %33 = vector.multi_reduction <add>, %32, %cst_17 [1] : vector<128x128xf32> to vector<128xf32>
      %34 = vector.shape_cast %33 : vector<128xf32> to vector<128x1xf32>
      %cst_18 = arith.constant 3.125000e-02 : f32
      %35 = vector.broadcast %cst_18 : f32 to vector<128x1xf32>
      %36 = arith.mulf %34, %35 : vector<128x1xf32>
      %cst_19 = arith.constant 9.99999974E-6 : f32
      %37 = vector.broadcast %cst_19 : f32 to vector<128x1xf32>
      %38 = arith.addf %36, %37 : vector<128x1xf32>
      %39 = math.rsqrt %38 : vector<128x1xf32>
      %40 = vector.broadcast %39 : vector<128x1xf32> to vector<128x128xf32>
      %41 = arith.mulf %29, %40 : vector<128x128xf32>
      %c0_20 = arith.constant 0 : index
      %c0_21 = arith.constant 0 : index
      %42 = vector.load %arg5[%c0_20, %c0_21] : memref<1x128xf32, #tpu.memory_space<vmem>>, vector<1x128xf32>
      %43 = vector.broadcast %42 : vector<1x128xf32> to vector<128x128xf32>
      %44 = arith.mulf %41, %43 : vector<128x128xf32>
      %c0_22 = arith.constant 0 : index
      %c0_23 = arith.constant 0 : index
      %45 = vector.load %arg6[%c0_22, %c0_23] : memref<1x128xf32, #tpu.memory_space<vmem>>, vector<1x128xf32>
      %46 = vector.broadcast %45 : vector<1x128xf32> to vector<128x128xf32>
      %47 = arith.addf %44, %46 : vector<128x128xf32>
      %c0_24 = arith.constant 0 : index
      %c0_25 = arith.constant 0 : index
      %48 = vector.load %arg7[%c0_24, %c0_25] : memref<128x128xf32, #tpu.memory_space<vmem>>, vector<128x128xf32>
      tpu.vector_store %arg7[%c0_24, %c0_25], %47 {strides = array<i32>} : memref<128x128xf32, #tpu.memory_space<vmem>>, vector<128x128xf32>,
    } else {
    }
    return
  }
  func.func @transform_0(%arg0: i32, %arg1: i32) -> (i32, i32) {
    %c0_i32 = arith.constant 0 : i32
    return %arg0, %arg1 : i32, i32
  }
  func.func @transform_1(%arg0: i32, %arg1: i32) -> (i32, i32) {
    %c0_i32 = arith.constant 0 : i32
    %c0_i32_0 = arith.constant 0 : i32
    %c0_i32_1 = arith.constant 0 : i32
    return %c0_i32, %c0_i32_0 : i32, i32
  }
  func.func @transform_2(%arg0: i32, %arg1: i32) -> (i32, i32) {
    %c0_i32 = arith.constant 0 : i32
    %c0_i32_0 = arith.constant 0 : i32
    %c0_i32_1 = arith.constant 0 : i32
    return %c0_i32, %c0_i32_0 : i32, i32
  }
  func.func @transform_3(%arg0: i32, %arg1: i32) -> (i32, i32) {
    %c0_i32 = arith.constant 0 : i32
    %c0_i32_0 = arith.constant 0 : i32
    %c0_i32_1 = arith.constant 0 : i32
    return %c0_i32, %c0_i32_0 : i32, i32
  }
  func.func @transform_4(%arg0: i32, %arg1: i32) -> (i32, i32) {
    %c0_i32 = arith.constant 0 : i32
    %c0_i32_0 = arith.constant 0 : i32
    %c0_i32_1 = arith.constant 0 : i32
    return %c0_i32, %c0_i32_0 : i32, i32
  }
  func.func @transform_5(%arg0: i32, %arg1: i32) -> (i32, i32) {
    %c0_i32 = arith.constant 0 : i32
    %c0_i32_0 = arith.constant 0 : i32
    return %arg0, %c0_i32 : i32, i32
  }
}

</mosaic_0001>

<llo_original>
// kernel: gnn_stack_forward.7
$region0: #{gnn_stack_forward.7}
  #allocation0 [shape = 'u32[]', space=smem, size = 0x4, offset = 0x4, fixed_abs, tag = 'smem constant byte address 0x4 - core index']
  #allocation1 [shape = 'u32[144,128]{1,0:T(1,128)}', space=vmem, size = 0x12000, scoped, tag = 'internal scratch']
  %s0 = inlined_call_operand.vmem [shape: f32[128,128], index: 0, kind: input, shape index: {}]
  %s1 = inlined_call_operand.vmem [shape: f32[128,128], index: 1, kind: input, shape index: {}]
  %s2 = inlined_call_operand.vmem [shape: bf16[128,128], index: 2, kind: output, shape index: {}]
  %s3 = sld [smem:[#allocation0]]
  $region18: #{gnn_stack_forward.7} parent=0
    _
  %s5 = ssub.s32 1, %s3
  %s6 = scalar_select 0, %s5, %s3
  // Predicated region
  $region2: #{gnn_stack_forward.7} parent=0 // pred_check
    _
  $region3: #{gnn_stack_forward.7} parent=0 // pred_check_branch
    %8 = sbr.rel (0) target = $region5
  $region4: #{gnn_stack_forward.7} parent=0 // pred_region
    _
  $region5: #{gnn_stack_forward.7} parent=0 // pred_fallthru
    _
  // Predicated region
  $region6: #{gnn_stack_forward.7} parent=0 // pred_check
    _
  $region7: #{gnn_stack_forward.7} parent=0 // pred_check_branch
    %10 = sbr.rel (0) target = $region9
  $region8: #{gnn_stack_forward.7} parent=0 // pred_region
    _
  $region9: #{gnn_stack_forward.7} parent=0 // pred_fallthru
    _
  %v12 = vld [vmem:[%s0] sm:$0xff]
  %v13 = vld [vmem:[%s0 + $0x8] sm:$0xff]
  %v14 = vld [vmem:[%s0 + $0x10] sm:$0xff]
  %v15 = vld [vmem:[%s0 + $0x18] sm:$0xff]
  %v16 = vld [vmem:[%s0 + $0x20] sm:$0xff]
  %v17 = vld [vmem:[%s0 + $0x28] sm:$0xff]
  %v18 = vld [vmem:[%s0 + $0x30] sm:$0xff]
  %v19 = vld [vmem:[%s0 + $0x38] sm:$0xff]
  %v20 = vld [vmem:[%s0 + $0x40] sm:$0xff]
  %v21 = vld [vmem:[%s0 + $0x48] sm:$0xff]
  %v22 = vld [vmem:[%s0 + $0x50] sm:$0xff]
  %v23 = vld [vmem:[%s0 + $0x58] sm:$0xff]
  %v24 = vld [vmem:[%s0 + $0x60] sm:$0xff]
  %v25 = vld [vmem:[%s0 + $0x68] sm:$0xff]
  %v26 = vld [vmem:[%s0 + $0x70] sm:$0xff]
  %v27 = vld [vmem:[%s0 + $0x78] sm:$0xff]
  %v28 = vpack.c.bf16 %v13, %v12
  %v29 = vpack.c.bf16 %v15, %v14
  %v30 = vpack.c.bf16 %v17, %v16
  %v31 = vpack.c.bf16 %v19, %v18
  %v32 = vpack.c.bf16 %v21, %v20
  %v33 = vpack.c.bf16 %v23, %v22
  %v34 = vpack.c.bf16 %v25, %v24
  %v35 = vpack.c.bf16 %v27, %v26
  %v36 = vld [vmem:[%s1] sm:$0xff]
  %v37 = vld [vmem:[%s1 + $0x8] sm:$0xff]
  %v38 = vld [vmem:[%s1 + $0x10] sm:$0xff]
  %v39 = vld [vmem:[%s1 + $0x18] sm:$0xff]
  %v40 = vld [vmem:[%s1 + $0x20] sm:$0xff]
  %v41 = vld [vmem:[%s1 + $0x28] sm:$0xff]
  %v42 = vld [vmem:[%s1 + $0x30] sm:$0xff]
  %v43 = vld [vmem:[%s1 + $0x38] sm:$0xff]
  %v44 = vld [vmem:[%s1 + $0x40] sm:$0xff]
  %v45 = vld [vmem:[%s1 + $0x48] sm:$0xff]
  %v46 = vld [vmem:[%s1 + $0x50] sm:$0xff]
  %v47 = vld [vmem:[%s1 + $0x58] sm:$0xff]
  %v48 = vld [vmem:[%s1 + $0x60] sm:$0xff]
  %v49 = vld [vmem:[%s1 + $0x68] sm:$0xff]
  %v50 = vld [vmem:[%s1 + $0x70] sm:$0xff]
  %v51 = vld [vmem:[%s1 + $0x78] sm:$0xff]
  %v52 = vpack.c.bf16 %v37, %v36
  %v53 = vpack.c.bf16 %v39, %v38
  %v54 = vpack.c.bf16 %v41, %v40
  %v55 = vpack.c.bf16 %v43, %v42
  %v56 = vpack.c.bf16 %v45, %v44
  %v57 = vpack.c.bf16 %v47, %v46
  %v58 = vpack.c.bf16 %v49, %v48
  %v59 = vpack.c.bf16 %v51, %v50
  %60 = vmatprep.subr.bf16.mxu0 0
  %61 = vmatpush1.bf16.msra.mxu0 %v59
  %62 = vmatprep.subr.bf16.mxu0 0
  %63 = vmatpush1.bf16.msra.mxu0 %v58
  %64 = vmatprep.subr.bf16.mxu0 0
  %65 = vmatpush1.bf16.msra.mxu0 %v57
  %66 = vmatprep.subr.bf16.mxu0 0
  %67 = vmatpush1.bf16.msra.mxu0 %v56
  %68 = vmatprep.subr.bf16.mxu0 0
  %69 = vmatpush1.bf16.msra.mxu0 %v55
  %70 = vmatprep.subr.bf16.mxu0 0
  %71 = vmatpush1.bf16.msra.mxu0 %v54
  %72 = vmatprep.subr.bf16.mxu0 0
  %73 = vmatpush1.bf16.msra.mxu0 %v53
  %74 = vmatprep.subr.bf16.mxu0 0
  %75 = vmatpush1.bf16.msra.mxu0 %v52
  %76 = vmatprep.subr.bf16.mxu0 0
  %77 = vmatpush2.bf16.msra.mxu0 0
  %78 = vmatprep.subr.bf16.mxu0 0
  %79 = vmatpush2.bf16.msra.mxu0 0
  %80 = vmatprep.subr.bf16.mxu0 0
  %81 = vmatpush2.bf16.msra.mxu0 0
  %82 = vmatprep.subr.bf16.mxu0 0
  %83 = vmatpush2.bf16.msra.mxu0 0
  %84 = vmatprep.subr.bf16.mxu0 0
  %85 = vmatpush2.bf16.msra.mxu0 0
  %86 = vmatprep.subr.bf16.mxu0 0
  %87 = vmatpush2.bf16.msra.mxu0 0
  %88 = vmatprep.subr.bf16.mxu0 0
  %89 = vmatpush2.bf16.msra.mxu0 0
  %90 = vmatprep.subr.bf16.mxu0 0
  %91 = vmatpush2.bf16.msra.mxu0 0
  %92 = vmatprep.mubr.bf16.mxu0 0
  %93 = vmatmul.mubr.bf16.gmra.mxu0 %v28
  %v94 = vpop.f32.mrf.mxu0
  %v95 = vadd.f32 0.0, %v94
  %v96 = vpop.f32.mrf.mxu0
  %v97 = vpop.f32.mrf.mxu0
  %v98 = vadd.f32 0.0, %v97
  %v99 = vpop.f32.mrf.mxu0
  %100 = vmatprep.mubr.bf16.mxu0 0
  %101 = vmatmul.mubr.bf16.gmra.mxu0 %v29
  %v102 = vpop.f32.mrf.mxu0
  %v103 = vadd.f32 0.0, %v102
  %v104 = vpop.f32.mrf.mxu0
  %v105 = vpop.f32.mrf.mxu0
  %v106 = vadd.f32 0.0, %v105
  %v107 = vpop.f32.mrf.mxu0
  %108 = vmatprep.mubr.bf16.mxu0 0
  %109 = vmatmul.mubr.bf16.gmra.mxu0 %v30
  %v110 = vpop.f32.mrf.mxu0
  %v111 = vadd.f32 0.0, %v110
  %v112 = vpop.f32.mrf.mxu0
  %v113 = vpop.f32.mrf.mxu0
  %v114 = vadd.f32 0.0, %v113
  %v115 = vpop.f32.mrf.mxu0
  %116 = vmatprep.mubr.bf16.mxu0 0
  %117 = vmatmul.mubr.bf16.gmra.mxu0 %v31
  %v118 = vpop.f32.mrf.mxu0
  %v119 = vadd.f32 0.0, %v118
  %v120 = vpop.f32.mrf.mxu0
  %v121 = vpop.f32.mrf.mxu0
  %v122 = vadd.f32 0.0, %v121
  %v123 = vpop.f32.mrf.mxu0
  %124 = vmatprep.mubr.bf16.mxu0 0
  %125 = vmatmul.mubr.bf16.gmra.mxu0 %v32
  %v126 = vpop.f32.mrf.mxu0
  %v127 = vadd.f32 0.0, %v126
  %v128 = vpop.f32.mrf.mxu0
  %v129 = vpop.f32.mrf.mxu0
  %v130 = vadd.f32 0.0, %v129
  %v131 = vpop.f32.mrf.mxu0
  %132 = vmatprep.mubr.bf16.mxu0 0
  %133 = vmatmul.mubr.bf16.gmra.mxu0 %v33
  %v134 = vpop.f32.mrf.mxu0
  %v135 = vadd.f32 0.0, %v134
  %v136 = vpop.f32.mrf.mxu0
  %v137 = vpop.f32.mrf.mxu0
  %v138 = vadd.f32 0.0, %v137
  %v139 = vpop.f32.mrf.mxu0
  %140 = vmatprep.mubr.bf16.mxu0 0
  %141 = vmatmul.mubr.bf16.gmra.mxu0 %v34
  %v142 = vpop.f32.mrf.mxu0
  %v143 = vadd.f32 0.0, %v142
  %v144 = vpop.f32.mrf.mxu0
  %v145 = vpop.f32.mrf.mxu0
  %v146 = vadd.f32 0.0, %v145
  %v147 = vpop.f32.mrf.mxu0
  %148 = vmatprep.mubr.bf16.mxu0 0
  %149 = vmatmul.mubr.bf16.gmra.mxu0 %v35
  %v150 = vpop.f32.mrf.mxu0
  %v151 = vadd.f32 0.0, %v150
  %v152 = vpop.f32.mrf.mxu0
  %v153 = vpop.f32.mrf.mxu0
  %v154 = vadd.f32 0.0, %v153
  %v155 = vpop.f32.mrf.mxu0
  %156 = vdwg.mxu0
  %v157 = vpack.c.bf16 %v98, %v95
  %v158 = vpack.c.bf16 %v106, %v103
  %v159 = vpack.c.bf16 %v114, %v111
  %v160 = vpack.c.bf16 %v122, %v119
  %v161 = vpack.c.bf16 %v130, %v127
  %v162 = vpack.c.bf16 %v138, %v135
  %v163 = vpack.c.bf16 %v146, %v143
  %v164 = vpack.c.bf16 %v154, %v151
  %v173 = vunpack.c.l.b16 %v157
  %v174 = vunpack.c.h.b16 %v157
  %v175 = vunpack.c.l.b16 %v158
  %v176 = vunpack.c.h.b16 %v158
  %v177 = vunpack.c.l.b16 %v159
  %v178 = vunpack.c.h.b16 %v159
  %v179 = vunpack.c.l.b16 %v160
  %v180 = vunpack.c.h.b16 %v160
  %v181 = vunpack.c.l.b16 %v161
  %v182 = vunpack.c.h.b16 %v161
  %v183 = vunpack.c.l.b16 %v162
  %v184 = vunpack.c.h.b16 %v162
  %v185 = vunpack.c.l.b16 %v163
  %v186 = vunpack.c.h.b16 %v163
  %v187 = vunpack.c.l.b16 %v164
  %v188 = vunpack.c.h.b16 %v164
  %v189 = vpack.c.b16 %v173, %v173
  %v190 = vpack.c.b16 %v174, %v174
  %v191 = vpack.c.b16 %v175, %v175
  %v192 = vpack.c.b16 %v176, %v176
  %v193 = vpack.c.b16 %v177, %v177
  %v194 = vpack.c.b16 %v178, %v178
  %v195 = vpack.c.b16 %v179, %v179
  %v196 = vpack.c.b16 %v180, %v180
  %v197 = vpack.c.b16 %v181, %v181
  %v198 = vpack.c.b16 %v182, %v182
  %v199 = vpack.c.b16 %v183, %v183
  %v200 = vpack.c.b16 %v184, %v184
  %v201 = vpack.c.b16 %v185, %v185
  %v202 = vpack.c.b16 %v186, %v186
  %v203 = vpack.c.b16 %v187, %v187
  %v204 = vpack.c.b16 %v188, %v188
  %221 = vst [vmem:[%s2] sm:$0xf] %v189
  %222 = vst [vmem:[%s2 + $0x4] sm:$0xf] %v190
  %223 = vst [vmem:[%s2 + $0x8] sm:$0xf] %v191
  %224 = vst [vmem:[%s2 + $0xc] sm:$0xf] %v192
  %225 = vst [vmem:[%s2 + $0x10] sm:$0xf] %v193
  %226 = vst [vmem:[%s2 + $0x14] sm:$0xf] %v194
  %227 = vst [vmem:[%s2 + $0x18] sm:$0xf] %v195
  %228 = vst [vmem:[%s2 + $0x1c] sm:$0xf] %v196
  %229 = vst [vmem:[%s2 + $0x20] sm:$0xf] %v197
  %230 = vst [vmem:[%s2 + $0x24] sm:$0xf] %v198
  %231 = vst [vmem:[%s2 + $0x28] sm:$0xf] %v199
  %232 = vst [vmem:[%s2 + $0x2c] sm:$0xf] %v200
  %233 = vst [vmem:[%s2 + $0x30] sm:$0xf] %v201
  %234 = vst [vmem:[%s2 + $0x34] sm:$0xf] %v202
  %235 = vst [vmem:[%s2 + $0x38] sm:$0xf] %v203
  %236 = vst [vmem:[%s2 + $0x3c] sm:$0xf] %v204
  // Predicated region
  $region10: #{gnn_stack_forward.7} parent=0 // pred_check
    _
  $region11: #{gnn_stack_forward.7} parent=0 // pred_check_branch
    %238 = sbr.rel (0) target = $region13
  $region12: #{gnn_stack_forward.7} parent=0 // pred_region
    _
  $region13: #{gnn_stack_forward.7} parent=0 // pred_fallthru
    _
  // Predicated region
  $region14: #{gnn_stack_forward.7} parent=0 // pred_check
    _
  $region15: #{gnn_stack_forward.7} parent=0 // pred_check_branch
    %240 = sbr.rel (0) target = $region17
  $region16: #{gnn_stack_forward.7} parent=0 // pred_region
    _
  $region17: #{gnn_stack_forward.7} parent=0 // pred_fallthru
    _

// kernel: gnn_stack_forward.12
$region0: #{gnn_stack_forward.12}
  #allocation0 [shape = 'u32[]', space=smem, size = 0x4, offset = 0x4, fixed_abs, tag = 'smem constant byte address 0x4 - core index']
  #allocation1 [shape = 'u32[144,128]{1,0:T(1,128)}', space=vmem, size = 0x12000, scoped, tag = 'internal scratch']
  %s0 = inlined_call_operand.vmem [shape: bf16[128,128], index: 0, kind: input, shape index: {}]
  %s1 = inlined_call_operand.vmem [shape: bf16[128,128], index: 1, kind: input, shape index: {}]
  %s2 = inlined_call_operand.vmem [shape: f32[1,128], index: 2, kind: input, shape index: {}]
  %s3 = inlined_call_operand.vmem [shape: f32[128,128], index: 3, kind: output, shape index: {}]
  %s4 = sld [smem:[#allocation0]]
  $region30: #{gnn_stack_forward.12} parent=0
    _
  %s6 = ssub.s32 1, %s4
  %s7 = scalar_select 0, %s6, %s4
  // Predicated region
  $region2: #{gnn_stack_forward.12} parent=0 // pred_check
    _
  $region3: #{gnn_stack_forward.12} parent=0 // pred_check_branch
    %9 = sbr.rel (0) target = $region5
  $region4: #{gnn_stack_forward.12} parent=0 // pred_region
    _
  $region5: #{gnn_stack_forward.12} parent=0 // pred_fallthru
    _
  // Predicated region
  $region6: #{gnn_stack_forward.12} parent=0 // pred_check
    _
  $region7: #{gnn_stack_forward.12} parent=0 // pred_check_branch
    %11 = sbr.rel (0) target = $region9
  $region8: #{gnn_stack_forward.12} parent=0 // pred_region
    _
  $region9: #{gnn_stack_forward.12} parent=0 // pred_fallthru
    _
  // Predicated region
  $region10: #{gnn_stack_forward.12} parent=0 // pred_check
    _
  $region11: #{gnn_stack_forward.12} parent=0 // pred_check_branch
    %13 = sbr.rel (0) target = $region13
  $region12: #{gnn_stack_forward.12} parent=0 // pred_region
    _
  $region13: #{gnn_stack_forward.12} parent=0 // pred_fallthru
    _
  %p15 = scmp.eq.s32.totalorder 0, 0
  // Predicated region
  $region14: #{gnn_stack_forward.12} parent=0 // pred_check
    %p16 = pneg %p15
  $region15: #{gnn_stack_forward.12} parent=0 // pred_check_branch
    %18 = sbr.rel (%p16) target = $region17
  $region16: #{gnn_stack_forward.12} parent=0 // pred_region
    %19 = vst [vmem:[%s3] sm:$0xff] 0.0
    %20 = vst [vmem:[%s3 + $0x8] sm:$0xff] 0.0
    %21 = vst [vmem:[%s3 + $0x10] sm:$0xff] 0.0
    %22 = vst [vmem:[%s3 + $0x18] sm:$0xff] 0.0
    %23 = vst [vmem:[%s3 + $0x20] sm:$0xff] 0.0
    %24 = vst [vmem:[%s3 + $0x28] sm:$0xff] 0.0
    %25 = vst [vmem:[%s3 + $0x30] sm:$0xff] 0.0
    %26 = vst [vmem:[%s3 + $0x38] sm:$0xff] 0.0
    %27 = vst [vmem:[%s3 + $0x40] sm:$0xff] 0.0
    %28 = vst [vmem:[%s3 + $0x48] sm:$0xff] 0.0
    %29 = vst [vmem:[%s3 + $0x50] sm:$0xff] 0.0
    %30 = vst [vmem:[%s3 + $0x58] sm:$0xff] 0.0
    %31 = vst [vmem:[%s3 + $0x60] sm:$0xff] 0.0
    %32 = vst [vmem:[%s3 + $0x68] sm:$0xff] 0.0
    %33 = vst [vmem:[%s3 + $0x70] sm:$0xff] 0.0
    %34 = vst [vmem:[%s3 + $0x78] sm:$0xff] 0.0
  $region17: #{gnn_stack_forward.12} parent=0 // pred_fallthru
    _
  %s35 = smul.u32 0, 128
  %v36 = vld [vmem:[%s3] sm:$0xff]
  %v37 = vld [vmem:[%s3 + $0x8] sm:$0xff]
  %v38 = vld [vmem:[%s3 + $0x10] sm:$0xff]
  %v39 = vld [vmem:[%s3 + $0x18] sm:$0xff]
  %v40 = vld [vmem:[%s3 + $0x20] sm:$0xff]
  %v41 = vld [vmem:[%s3 + $0x28] sm:$0xff]
  %v42 = vld [vmem:[%s3 + $0x30] sm:$0xff]
  %v43 = vld [vmem:[%s3 + $0x38] sm:$0xff]
  %v44 = vld [vmem:[%s3 + $0x40] sm:$0xff]
  %v45 = vld [vmem:[%s3 + $0x48] sm:$0xff]
  %v46 = vld [vmem:[%s3 + $0x50] sm:$0xff]
  %v47 = vld [vmem:[%s3 + $0x58] sm:$0xff]
  %v48 = vld [vmem:[%s3 + $0x60] sm:$0xff]
  %v49 = vld [vmem:[%s3 + $0x68] sm:$0xff]
  %v50 = vld [vmem:[%s3 + $0x70] sm:$0xff]
  %v51 = vld [vmem:[%s3 + $0x78] sm:$0xff]
  %v52 = vld [vmem:[%s0] sm:$0xf]
  %v53 = vld [vmem:[%s0 + $0x4] sm:$0xf]
  %v54 = vld [vmem:[%s0 + $0x8] sm:$0xf]
  %v55 = vld [vmem:[%s0 + $0xc] sm:$0xf]
  %v56 = vld [vmem:[%s0 + $0x10] sm:$0xf]
  %v57 = vld [vmem:[%s0 + $0x14] sm:$0xf]
  %v58 = vld [vmem:[%s0 + $0x18] sm:$0xf]
  %v59 = vld [vmem:[%s0 + $0x1c] sm:$0xf]
  %v60 = vld [vmem:[%s0 + $0x20] sm:$0xf]
  %v61 = vld [vmem:[%s0 + $0x24] sm:$0xf]
  %v62 = vld [vmem:[%s0 + $0x28] sm:$0xf]
  %v63 = vld [vmem:[%s0 + $0x2c] sm:$0xf]
  %v64 = vld [vmem:[%s0 + $0x30] sm:$0xf]
  %v65 = vld [vmem:[%s0 + $0x34] sm:$0xf]
  %v66 = vld [vmem:[%s0 + $0x38] sm:$0xf]
  %v67 = vld [vmem:[%s0 + $0x3c] sm:$0xf]
  %s68 = sshra.s32 %s35, 3
  %s69 = sand.u32 %s35, 7
  %s70 = smul.addr %s68, 4
  %s71 = scalar_lea.vmem %s1, %s70
  %v72 = vld [vmem:[%s71] sm:$0xf]
  %v73 = vld [vmem:[%s71 + $0x4] sm:$0xf]
  %v74 = vld [vmem:[%s71 + $0x8] sm:$0xf]
  %v75 = vld [vmem:[%s71 + $0xc] sm:$0xf]
  %v76 = vld [vmem:[%s71 + $0x10] sm:$0xf]
  %v77 = vld [vmem:[%s71 + $0x14] sm:$0xf]
  %v78 = vld [vmem:[%s71 + $0x18] sm:$0xf]
  %v79 = vld [vmem:[%s71 + $0x1c] sm:$0xf]
  %v80 = vld [vmem:[%s71 + $0x20] sm:$0xf]
  %v81 = vld [vmem:[%s71 + $0x24] sm:$0xf]
  %v82 = vld [vmem:[%s71 + $0x28] sm:$0xf]
  %v83 = vld [vmem:[%s71 + $0x2c] sm:$0xf]
  %v84 = vld [vmem:[%s71 + $0x30] sm:$0xf]
  %v85 = vld [vmem:[%s71 + $0x34] sm:$0xf]
  %v86 = vld [vmem:[%s71 + $0x38] sm:$0xf]
  %v87 = vld [vmem:[%s71 + $0x3c] sm:$0xf]
  %v104 = vunpack.c.l.b16 %v52
  %v105 = vunpack.c.l.b16 %v53
  %v106 = vunpack.c.l.b16 %v54
  %v107 = vunpack.c.l.b16 %v55
  %v108 = vunpack.c.l.b16 %v56
  %v109 = vunpack.c.l.b16 %v57
  %v110 = vunpack.c.l.b16 %v58
  %v111 = vunpack.c.l.b16 %v59
  %v112 = vunpack.c.l.b16 %v60
  %v113 = vunpack.c.l.b16 %v61
  %v114 = vunpack.c.l.b16 %v62
  %v115 = vunpack.c.l.b16 %v63
  %v116 = vunpack.c.l.b16 %v64
  %v117 = vunpack.c.l.b16 %v65
  %v118 = vunpack.c.l.b16 %v66
  %v119 = vunpack.c.l.b16 %v67
  %v120 = vpack.c.b16 %v105, %v104
  %v121 = vpack.c.b16 %v107, %v106
  %v122 = vpack.c.b16 %v109, %v108
  %v123 = vpack.c.b16 %v111, %v110
  %v124 = vpack.c.b16 %v113, %v112
  %v125 = vpack.c.b16 %v115, %v114
  %v126 = vpack.c.b16 %v117, %v116
  %v127 = vpack.c.b16 %v119, %v118
  %v152 = vunpack.c.l.b16 %v72
  %v153 = vunpack.c.l.b16 %v73
  %v154 = vunpack.c.l.b16 %v74
  %v155 = vunpack.c.l.b16 %v75
  %v156 = vunpack.c.l.b16 %v76
  %v157 = vunpack.c.l.b16 %v77
  %v158 = vunpack.c.l.b16 %v78
  %v159 = vunpack.c.l.b16 %v79
  %v160 = vunpack.c.l.b16 %v80
  %v161 = vunpack.c.l.b16 %v81
  %v162 = vunpack.c.l.b16 %v82
  %v163 = vunpack.c.l.b16 %v83
  %v164 = vunpack.c.l.b16 %v84
  %v165 = vunpack.c.l.b16 %v85
  %v166 = vunpack.c.l.b16 %v86
  %v167 = vunpack.c.l.b16 %v87
  %v168 = vpack.c.b16 %v153, %v152
  %v169 = vpack.c.b16 %v155, %v154
  %v170 = vpack.c.b16 %v157, %v156
  %v171 = vpack.c.b16 %v159, %v158
  %v172 = vpack.c.b16 %v161, %v160
  %v173 = vpack.c.b16 %v163, %v162
  %v174 = vpack.c.b16 %v165, %v164
  %v175 = vpack.c.b16 %v167, %v166
  %184 = vmatprep.subr.bf16.mxu0 0
  %185 = vmatpush1.bf16.msra.mxu0 %v175
  %186 = vmatprep.subr.bf16.mxu0 0
  %187 = vmatpush1.bf16.msra.mxu0 %v174
  %188 = vmatprep.subr.bf16.mxu0 0
  %189 = vmatpush1.bf16.msra.mxu0 %v173
  %190 = vmatprep.subr.bf16.mxu0 0
  %191 = vmatpush1.bf16.msra.mxu0 %v172
  %192 = vmatprep.subr.bf16.mxu0 0
  %193 = vmatpush1.bf16.msra.mxu0 %v171
  %194 = vmatprep.subr.bf16.mxu0 0
  %195 = vmatpush1.bf16.msra.mxu0 %v170
  %196 = vmatprep.subr.bf16.mxu0 0
  %197 = vmatpush1.bf16.msra.mxu0 %v169
  %198 = vmatprep.subr.bf16.mxu0 0
  %199 = vmatpush1.bf16.msra.mxu0 %v168
  %200 = vmatprep.subr.bf16.mxu0 0
  %201 = vmatpush2.bf16.msra.mxu0 0
  %202 = vmatprep.subr.bf16.mxu0 0
  %203 = vmatpush2.bf16.msra.mxu0 0
  %204 = vmatprep.subr.bf16.mxu0 0
  %205 = vmatpush2.bf16.msra.mxu0 0
  %206 = vmatprep.subr.bf16.mxu0 0
  %207 = vmatpush2.bf16.msra.mxu0 0
  %208 = vmatprep.subr.bf16.mxu0 0
  %209 = vmatpush2.bf16.msra.mxu0 0
  %210 = vmatprep.subr.bf16.mxu0 0
  %211 = vmatpush2.bf16.msra.mxu0 0
  %212 = vmatprep.subr.bf16.mxu0 0
  %213 = vmatpush2.bf16.msra.mxu0 0
  %214 = vmatprep.subr.bf16.mxu0 0
  %215 = vmatpush2.bf16.msra.mxu0 0
  %216 = vmatprep.mubr.bf16.mxu0 0
  %217 = vmatmul.mubr.bf16.gmra.mxu0 %v120
  %v218 = vpop.f32.mrf.mxu0
  %v219 = vadd.f32 0.0, %v218
  %v220 = vpop.f32.mrf.mxu0
  %v221 = vpop.f32.mrf.mxu0
  %v222 = vadd.f32 0.0, %v221
  %v223 = vpop.f32.mrf.mxu0
  %224 = vmatprep.mubr.bf16.mxu0 0
  %225 = vmatmul.mubr.bf16.gmra.mxu0 %v121
  %v226 = vpop.f32.mrf.mxu0
  %v227 = vadd.f32 0.0, %v226
  %v228 = vpop.f32.mrf.mxu0
  %v229 = vpop.f32.mrf.mxu0
  %v230 = vadd.f32 0.0, %v229
  %v231 = vpop.f32.mrf.mxu0
  %232 = vmatprep.mubr.bf16.mxu0 0
  %233 = vmatmul.mubr.bf16.gmra.mxu0 %v122
  %v234 = vpop.f32.mrf.mxu0
  %v235 = vadd.f32 0.0, %v234
  %v236 = vpop.f32.mrf.mxu0
  %v237 = vpop.f32.mrf.mxu0
  %v238 = vadd.f32 0.0, %v237
  %v239 = vpop.f32.mrf.mxu0
  %240 = vmatprep.mubr.bf16.mxu0 0
  %241 = vmatmul.mubr.bf16.gmra.mxu0 %v123
  %v242 = vpop.f32.mrf.mxu0
  %v243 = vadd.f32 0.0, %v242
  %v244 = vpop.f32.mrf.mxu0
  %v245 = vpop.f32.mrf.mxu0
  %v246 = vadd.f32 0.0, %v245
  %v247 = vpop.f32.mrf.mxu0
  %248 = vmatprep.mubr.bf16.mxu0 0
  %249 = vmatmul.mubr.bf16.gmra.mxu0 %v124
  %v250 = vpop.f32.mrf.mxu0
  %v251 = vadd.f32 0.0, %v250
  %v252 = vpop.f32.mrf.mxu0
  %v253 = vpop.f32.mrf.mxu0
  %v254 = vadd.f32 0.0, %v253
  %v255 = vpop.f32.mrf.mxu0
  %256 = vmatprep.mubr.bf16.mxu0 0
  %257 = vmatmul.mubr.bf16.gmra.mxu0 %v125
  %v258 = vpop.f32.mrf.mxu0
  %v259 = vadd.f32 0.0, %v258
  %v260 = vpop.f32.mrf.mxu0
  %v261 = vpop.f32.mrf.mxu0
  %v262 = vadd.f32 0.0, %v261
  %v263 = vpop.f32.mrf.mxu0
  %264 = vmatprep.mubr.bf16.mxu0 0
  %265 = vmatmul.mubr.bf16.gmra.mxu0 %v126
  %v266 = vpop.f32.mrf.mxu0
  %v267 = vadd.f32 0.0, %v266
  %v268 = vpop.f32.mrf.mxu0
  %v269 = vpop.f32.mrf.mxu0
  %v270 = vadd.f32 0.0, %v269
  %v271 = vpop.f32.mrf.mxu0
  %272 = vmatprep.mubr.bf16.mxu0 0
  %273 = vmatmul.mubr.bf16.gmra.mxu0 %v127
  %v274 = vpop.f32.mrf.mxu0
  %v275 = vadd.f32 0.0, %v274
  %v276 = vpop.f32.mrf.mxu0
  %v277 = vpop.f32.mrf.mxu0
  %v278 = vadd.f32 0.0, %v277
  %v279 = vpop.f32.mrf.mxu0
  %280 = vdwg.mxu0
  %v281 = vadd.f32 %v36, %v219
  %v282 = vadd.f32 %v37, %v222
  %v283 = vadd.f32 %v38, %v227
  %v284 = vadd.f32 %v39, %v230
  %v285 = vadd.f32 %v40, %v235
  %v286 = vadd.f32 %v41, %v238
  %v287 = vadd.f32 %v42, %v243
  %v288 = vadd.f32 %v43, %v246
  %v289 = vadd.f32 %v44, %v251
  %v290 = vadd.f32 %v45, %v254
  %v291 = vadd.f32 %v46, %v259
  %v292 = vadd.f32 %v47, %v262
  %v293 = vadd.f32 %v48, %v267
  %v294 = vadd.f32 %v49, %v270
  %v295 = vadd.f32 %v50, %v275
  %v296 = vadd.f32 %v51, %v278
  %297 = vst [vmem:[%s3] sm:$0xff] %v281
  %298 = vst [vmem:[%s3 + $0x8] sm:$0xff] %v282
  %299 = vst [vmem:[%s3 + $0x10] sm:$0xff] %v283
  %300 = vst [vmem:[%s3 + $0x18] sm:$0xff] %v284
  %301 = vst [vmem:[%s3 + $0x20] sm:$0xff] %v285
  %302 = vst [vmem:[%s3 + $0x28] sm:$0xff] %v286
  %303 = vst [vmem:[%s3 + $0x30] sm:$0xff] %v287
  %304 = vst [vmem:[%s3 + $0x38] sm:$0xff] %v288
  %305 = vst [vmem:[%s3 + $0x40] sm:$0xff] %v289
  %306 = vst [vmem:[%s3 + $0x48] sm:$0xff] %v290
  %307 = vst [vmem:[%s3 + $0x50] sm:$0xff] %v291
  %308 = vst [vmem:[%s3 + $0x58] sm:$0xff] %v292
  %309 = vst [vmem:[%s3 + $0x60] sm:$0xff] %v293
  %310 = vst [vmem:[%s3 + $0x68] sm:$0xff] %v294
  %311 = vst [vmem:[%s3 + $0x70] sm:$0xff] %v295
  %312 = vst [vmem:[%s3 + $0x78] sm:$0xff] %v296
  // Predicated region
  $region18: #{gnn_stack_forward.12} parent=0 // pred_check
    %p313 = pneg %p15
  $region19: #{gnn_stack_forward.12} parent=0 // pred_check_branch
    %315 = sbr.rel (%p313) target = $region21
  $region20: #{gnn_stack_forward.12} parent=0 // pred_region
    %v316 = vld [vmem:[%s3] sm:$0xff]
    %v317 = vld [vmem:[%s3 + $0x8] sm:$0xff]
    %v318 = vld [vmem:[%s3 + $0x10] sm:$0xff]
    %v319 = vld [vmem:[%s3 + $0x18] sm:$0xff]
    %v320 = vld [vmem:[%s3 + $0x20] sm:$0xff]
    %v321 = vld [vmem:[%s3 + $0x28] sm:$0xff]
    %v322 = vld [vmem:[%s3 + $0x30] sm:$0xff]
    %v323 = vld [vmem:[%s3 + $0x38] sm:$0xff]
    %v324 = vld [vmem:[%s3 + $0x40] sm:$0xff]
    %v325 = vld [vmem:[%s3 + $0x48] sm:$0xff]
    %v326 = vld [vmem:[%s3 + $0x50] sm:$0xff]
    %v327 = vld [vmem:[%s3 + $0x58] sm:$0xff]
    %v328 = vld [vmem:[%s3 + $0x60] sm:$0xff]
    %v329 = vld [vmem:[%s3 + $0x68] sm:$0xff]
    %v330 = vld [vmem:[%s3 + $0x70] sm:$0xff]
    %v331 = vld [vmem:[%s3 + $0x78] sm:$0xff]
    %v332 = vld [vmem:[%s2] sm:$0x1]
    %v334 = vlaneseq
    %v335 = vshrl.u32 %v334, 7
    %v336 = vsub.s32 0, %v335
    %v337 = vrot.slane %v332, %v336
    %v339 = vadd.f32 %v316, %v337
    %v340 = vadd.f32 %v317, %v337
    %v341 = vadd.f32 %v318, %v337
    %v342 = vadd.f32 %v319, %v337
    %v343 = vadd.f32 %v320, %v337
    %v344 = vadd.f32 %v321, %v337
    %v345 = vadd.f32 %v322, %v337
    %v346 = vadd.f32 %v323, %v337
    %v347 = vadd.f32 %v324, %v337
    %v348 = vadd.f32 %v325, %v337
    %v349 = vadd.f32 %v326, %v337
    %v350 = vadd.f32 %v327, %v337
    %v351 = vadd.f32 %v328, %v337
    %v352 = vadd.f32 %v329, %v337
    %v353 = vadd.f32 %v330, %v337
    %v354 = vadd.f32 %v331, %v337
    %v355 = vmax.f32 %v339, 0.0
    %v356 = vmax.f32 %v340, 0.0
    %v357 = vmax.f32 %v341, 0.0
    %v358 = vmax.f32 %v342, 0.0
    %v359 = vmax.f32 %v343, 0.0
    %v360 = vmax.f32 %v344, 0.0
    %v361 = vmax.f32 %v345, 0.0
    %v362 = vmax.f32 %v346, 0.0
    %v363 = vmax.f32 %v347, 0.0
    %v364 = vmax.f32 %v348, 0.0
    %v365 = vmax.f32 %v349, 0.0
    %v366 = vmax.f32 %v350, 0.0
    %v367 = vmax.f32 %v351, 0.0
    %v368 = vmax.f32 %v352, 0.0
    %v369 = vmax.f32 %v353, 0.0
    %v370 = vmax.f32 %v354, 0.0
    %371 = vst [vmem:[%s3] sm:$0xff] %v355
    %372 = vst [vmem:[%s3 + $0x8] sm:$0xff] %v356
    %373 = vst [vmem:[%s3 + $0x10] sm:$0xff] %v357
    %374 = vst [vmem:[%s3 + $0x18] sm:$0xff] %v358
    %375 = vst [vmem:[%s3 + $0x20] sm:$0xff] %v359
    %376 = vst [vmem:[%s3 + $0x28] sm:$0xff] %v360
    %377 = vst [vmem:[%s3 + $0x30] sm:$0xff] %v361
    %378 = vst [vmem:[%s3 + $0x38] sm:$0xff] %v362
    %379 = vst [vmem:[%s3 + $0x40] sm:$0xff] %v363
    %380 = vst [vmem:[%s3 + $0x48] sm:$0xff] %v364
    %381 = vst [vmem:[%s3 + $0x50] sm:$0xff] %v365
    %382 = vst [vmem:[%s3 + $0x58] sm:$0xff] %v366
    %383 = vst [vmem:[%s3 + $0x60] sm:$0xff] %v367
    %384 = vst [vmem:[%s3 + $0x68] sm:$0xff] %v368
    %385 = vst [vmem:[%s3 + $0x70] sm:$0xff] %v369
    %386 = vst [vmem:[%s3 + $0x78] sm:$0xff] %v370
  $region21: #{gnn_stack_forward.12} parent=0 // pred_fallthru
    _
  // Predicated region
  $region22: #{gnn_stack_forward.12} parent=0 // pred_check
    _
  $region23: #{gnn_stack_forward.12} parent=0 // pred_check_branch
    %388 = sbr.rel (0) target = $region25
  $region24: #{gnn_stack_forward.12} parent=0 // pred_region
    _
  $region25: #{gnn_stack_forward.12} parent=0 // pred_fallthru
    _
  // Predicated region
  $region26: #{gnn_stack_forward.12} parent=0 // pred_check
    _
  $region27: #{gnn_stack_forward.12} parent=0 // pred_check_branch
    %390 = sbr.rel (0) target = $region29
  $region28: #{gnn_stack_forward.12} parent=0 // pred_region
    _
  $region29: #{gnn_stack_forward.12} parent=0 // pred_fallthru
    _

// kernel: gnn_stack_forward.13
$region0: #{gnn_stack_forward.13}
  #allocation0 [shape = 'u32[]', space=smem, size = 0x4, offset = 0x4, fixed_abs, tag = 'smem constant byte address 0x4 - core index']
  #allocation1 [shape = 'u32[144,128]{1,0:T(1,128)}', space=vmem, size = 0x12000, scoped, tag = 'internal scratch']
  %s0 = inlined_call_operand.vmem [shape: f32[128,128], index: 0, kind: input, shape index: {}]
  %s1 = inlined_call_operand.vmem [shape: bf16[128,128], index: 1, kind: input, shape index: {}]
  %s2 = inlined_call_operand.vmem [shape: f32[1,128], index: 2, kind: input, shape index: {}]
  %s3 = inlined_call_operand.vmem [shape: bf16[128,128], index: 3, kind: input, shape index: {}]
  %s4 = inlined_call_operand.vmem [shape: f32[1,128], index: 4, kind: input, shape index: {}]
  %s5 = inlined_call_operand.vmem [shape: f32[128,128], index: 5, kind: output, shape index: {}]
  %s6 = sld [smem:[#allocation0]]
  $region30: #{gnn_stack_forward.13} parent=0
    _
  %s8 = ssub.s32 1, %s6
  %s9 = scalar_select 0, %s8, %s6
  // Predicated region
  $region2: #{gnn_stack_forward.13} parent=0 // pred_check
    _
  $region3: #{gnn_stack_forward.13} parent=0 // pred_check_branch
    %11 = sbr.rel (0) target = $region5
  $region4: #{gnn_stack_forward.13} parent=0 // pred_region
    _
  $region5: #{gnn_stack_forward.13} parent=0 // pred_fallthru
    _
  // Predicated region
  $region6: #{gnn_stack_forward.13} parent=0 // pred_check
    _
  $region7: #{gnn_stack_forward.13} parent=0 // pred_check_branch
    %13 = sbr.rel (0) target = $region9
  $region8: #{gnn_stack_forward.13} parent=0 // pred_region
    _
  $region9: #{gnn_stack_forward.13} parent=0 // pred_fallthru
    _
  // Predicated region
  $region10: #{gnn_stack_forward.13} parent=0 // pred_check
    _
  $region11: #{gnn_stack_forward.13} parent=0 // pred_check_branch
    %15 = sbr.rel (0) target = $region13
  $region12: #{gnn_stack_forward.13} parent=0 // pred_region
    _
  $region13: #{gnn_stack_forward.13} parent=0 // pred_fallthru
    _
  // Predicated region
  $region14: #{gnn_stack_forward.13} parent=0 // pred_check
    _
  $region15: #{gnn_stack_forward.13} parent=0 // pred_check_branch
    %17 = sbr.rel (0) target = $region17
  $region16: #{gnn_stack_forward.13} parent=0 // pred_region
    _
  $region17: #{gnn_stack_forward.13} parent=0 // pred_fallthru
    _
  // Predicated region
  $region18: #{gnn_stack_forward.13} parent=0 // pred_check
    _
  $region19: #{gnn_stack_forward.13} parent=0 // pred_check_branch
    %19 = sbr.rel (0) target = $region21
  $region20: #{gnn_stack_forward.13} parent=0 // pred_region
    _
  $region21: #{gnn_stack_forward.13} parent=0 // pred_fallthru
    _
  %v21 = vld [vmem:[%s0] sm:$0xff]
  %v22 = vld [vmem:[%s0 + $0x8] sm:$0xff]
  %v23 = vld [vmem:[%s0 + $0x10] sm:$0xff]
  %v24 = vld [vmem:[%s0 + $0x18] sm:$0xff]
  %v25 = vld [vmem:[%s0 + $0x20] sm:$0xff]
  %v26 = vld [vmem:[%s0 + $0x28] sm:$0xff]
  %v27 = vld [vmem:[%s0 + $0x30] sm:$0xff]
  %v28 = vld [vmem:[%s0 + $0x38] sm:$0xff]
  %v29 = vld [vmem:[%s0 + $0x40] sm:$0xff]
  %v30 = vld [vmem:[%s0 + $0x48] sm:$0xff]
  %v31 = vld [vmem:[%s0 + $0x50] sm:$0xff]
  %v32 = vld [vmem:[%s0 + $0x58] sm:$0xff]
  %v33 = vld [vmem:[%s0 + $0x60] sm:$0xff]
  %v34 = vld [vmem:[%s0 + $0x68] sm:$0xff]
  %v35 = vld [vmem:[%s0 + $0x70] sm:$0xff]
  %v36 = vld [vmem:[%s0 + $0x78] sm:$0xff]
  %v37 = vpack.c.bf16 %v22, %v21
  %v38 = vpack.c.bf16 %v24, %v23
  %v39 = vpack.c.bf16 %v26, %v25
  %v40 = vpack.c.bf16 %v28, %v27
  %v41 = vpack.c.bf16 %v30, %v29
  %v42 = vpack.c.bf16 %v32, %v31
  %v43 = vpack.c.bf16 %v34, %v33
  %v44 = vpack.c.bf16 %v36, %v35
  %v45 = vld [vmem:[%s1] sm:$0xf]
  %v46 = vld [vmem:[%s1 + $0x4] sm:$0xf]
  %v47 = vld [vmem:[%s1 + $0x8] sm:$0xf]
  %v48 = vld [vmem:[%s1 + $0xc] sm:$0xf]
  %v49 = vld [vmem:[%s1 + $0x10] sm:$0xf]
  %v50 = vld [vmem:[%s1 + $0x14] sm:$0xf]
  %v51 = vld [vmem:[%s1 + $0x18] sm:$0xf]
  %v52 = vld [vmem:[%s1 + $0x1c] sm:$0xf]
  %v53 = vld [vmem:[%s1 + $0x20] sm:$0xf]
  %v54 = vld [vmem:[%s1 + $0x24] sm:$0xf]
  %v55 = vld [vmem:[%s1 + $0x28] sm:$0xf]
  %v56 = vld [vmem:[%s1 + $0x2c] sm:$0xf]
  %v57 = vld [vmem:[%s1 + $0x30] sm:$0xf]
  %v58 = vld [vmem:[%s1 + $0x34] sm:$0xf]
  %v59 = vld [vmem:[%s1 + $0x38] sm:$0xf]
  %v60 = vld [vmem:[%s1 + $0x3c] sm:$0xf]
  %v61 = vld [vmem:[%s2] sm:$0x1]
  %v63 = vlaneseq
  %v64 = vshrl.u32 %v63, 7
  %v65 = vsub.s32 0, %v64
  %v66 = vrot.slane %v61, %v65
  %v84 = vunpack.c.l.b16 %v45
  %v85 = vunpack.c.l.b16 %v46
  %v86 = vunpack.c.l.b16 %v47
  %v87 = vunpack.c.l.b16 %v48
  %v88 = vunpack.c.l.b16 %v49
  %v89 = vunpack.c.l.b16 %v50
  %v90 = vunpack.c.l.b16 %v51
  %v91 = vunpack.c.l.b16 %v52
  %v92 = vunpack.c.l.b16 %v53
  %v93 = vunpack.c.l.b16 %v54
  %v94 = vunpack.c.l.b16 %v55
  %v95 = vunpack.c.l.b16 %v56
  %v96 = vunpack.c.l.b16 %v57
  %v97 = vunpack.c.l.b16 %v58
  %v98 = vunpack.c.l.b16 %v59
  %v99 = vunpack.c.l.b16 %v60
  %v100 = vpack.c.b16 %v85, %v84
  %v101 = vpack.c.b16 %v87, %v86
  %v102 = vpack.c.b16 %v89, %v88
  %v103 = vpack.c.b16 %v91, %v90
  %v104 = vpack.c.b16 %v93, %v92
  %v105 = vpack.c.b16 %v95, %v94
  %v106 = vpack.c.b16 %v97, %v96
  %v107 = vpack.c.b16 %v99, %v98
  %116 = vmatprep.subr.bf16.mxu0 0
  %117 = vmatpush1.bf16.msra.mxu0 %v107
  %118 = vmatprep.subr.bf16.mxu0 0
  %119 = vmatpush1.bf16.msra.mxu0 %v106
  %120 = vmatprep.subr.bf16.mxu0 0
  %121 = vmatpush1.bf16.msra.mxu0 %v105
  %122 = vmatprep.subr.bf16.mxu0 0
  %123 = vmatpush1.bf16.msra.mxu0 %v104
  %124 = vmatprep.subr.bf16.mxu0 0
  %125 = vmatpush1.bf16.msra.mxu0 %v103
  %126 = vmatprep.subr.bf16.mxu0 0
  %127 = vmatpush1.bf16.msra.mxu0 %v102
  %128 = vmatprep.subr.bf16.mxu0 0
  %129 = vmatpush1.bf16.msra.mxu0 %v101
  %130 = vmatprep.subr.bf16.mxu0 0
  %131 = vmatpush1.bf16.msra.mxu0 %v100
  %132 = vmatprep.subr.bf16.mxu0 0
  %133 = vmatpush2.bf16.msra.mxu0 0
  %134 = vmatprep.subr.bf16.mxu0 0
  %135 = vmatpush2.bf16.msra.mxu0 0
  %136 = vmatprep.subr.bf16.mxu0 0
  %137 = vmatpush2.bf16.msra.mxu0 0
  %138 = vmatprep.subr.bf16.mxu0 0
  %139 = vmatpush2.bf16.msra.mxu0 0
  %140 = vmatprep.subr.bf16.mxu0 0
  %141 = vmatpush2.bf16.msra.mxu0 0
  %142 = vmatprep.subr.bf16.mxu0 0
  %143 = vmatpush2.bf16.msra.mxu0 0
  %144 = vmatprep.subr.bf16.mxu0 0
  %145 = vmatpush2.bf16.msra.mxu0 0
  %146 = vmatprep.subr.bf16.mxu0 0
  %147 = vmatpush2.bf16.msra.mxu0 0
  %148 = vmatprep.mubr.bf16.mxu0 0
  %149 = vmatmul.mubr.bf16.gmra.mxu0 %v37
  %v150 = vpop.f32.mrf.mxu0
  %v151 = vadd.f32 %v66, %v150
  %v152 = vpop.f32.mrf.mxu0
  %v153 = vpop.f32.mrf.mxu0
  %v154 = vadd.f32 %v66, %v153
  %v155 = vpop.f32.mrf.mxu0
  %156 = vmatprep.mubr.bf16.mxu0 0
  %157 = vmatmul.mubr.bf16.gmra.mxu0 %v38
  %v158 = vpop.f32.mrf.mxu0
  %v159 = vadd.f32 %v66, %v158
  %v160 = vpop.f32.mrf.mxu0
  %v161 = vpop.f32.mrf.mxu0
  %v162 = vadd.f32 %v66, %v161
  %v163 = vpop.f32.mrf.mxu0
  %164 = vmatprep.mubr.bf16.mxu0 0
  %165 = vmatmul.mubr.bf16.gmra.mxu0 %v39
  %v166 = vpop.f32.mrf.mxu0
  %v167 = vadd.f32 %v66, %v166
  %v168 = vpop.f32.mrf.mxu0
  %v169 = vpop.f32.mrf.mxu0
  %v170 = vadd.f32 %v66, %v169
  %v171 = vpop.f32.mrf.mxu0
  %172 = vmatprep.mubr.bf16.mxu0 0
  %173 = vmatmul.mubr.bf16.gmra.mxu0 %v40
  %v174 = vpop.f32.mrf.mxu0
  %v175 = vadd.f32 %v66, %v174
  %v176 = vpop.f32.mrf.mxu0
  %v177 = vpop.f32.mrf.mxu0
  %v178 = vadd.f32 %v66, %v177
  %v179 = vpop.f32.mrf.mxu0
  %180 = vmatprep.mubr.bf16.mxu0 0
  %181 = vmatmul.mubr.bf16.gmra.mxu0 %v41
  %v182 = vpop.f32.mrf.mxu0
  %v183 = vadd.f32 %v66, %v182
  %v184 = vpop.f32.mrf.mxu0
  %v185 = vpop.f32.mrf.mxu0
  %v186 = vadd.f32 %v66, %v185
  %v187 = vpop.f32.mrf.mxu0
  %188 = vmatprep.mubr.bf16.mxu0 0
  %189 = vmatmul.mubr.bf16.gmra.mxu0 %v42
  %v190 = vpop.f32.mrf.mxu0
  %v191 = vadd.f32 %v66, %v190
  %v192 = vpop.f32.mrf.mxu0
  %v193 = vpop.f32.mrf.mxu0
  %v194 = vadd.f32 %v66, %v193
  %v195 = vpop.f32.mrf.mxu0
  %196 = vmatprep.mubr.bf16.mxu0 0
  %197 = vmatmul.mubr.bf16.gmra.mxu0 %v43
  %v198 = vpop.f32.mrf.mxu0
  %v199 = vadd.f32 %v66, %v198
  %v200 = vpop.f32.mrf.mxu0
  %v201 = vpop.f32.mrf.mxu0
  %v202 = vadd.f32 %v66, %v201
  %v203 = vpop.f32.mrf.mxu0
  %204 = vmatprep.mubr.bf16.mxu0 0
  %205 = vmatmul.mubr.bf16.gmra.mxu0 %v44
  %v206 = vpop.f32.mrf.mxu0
  %v207 = vadd.f32 %v66, %v206
  %v208 = vpop.f32.mrf.mxu0
  %v209 = vpop.f32.mrf.mxu0
  %v210 = vadd.f32 %v66, %v209
  %v211 = vpop.f32.mrf.mxu0
  %212 = vdwg.mxu0
  %v213 = vpack.c.bf16 %v154, %v151
  %v214 = vpack.c.bf16 %v162, %v159
  %v215 = vpack.c.bf16 %v170, %v167
  %v216 = vpack.c.bf16 %v178, %v175
  %v217 = vpack.c.bf16 %v186, %v183
  %v218 = vpack.c.bf16 %v194, %v191
  %v219 = vpack.c.bf16 %v202, %v199
  %v220 = vpack.c.bf16 %v210, %v207
  %v221 = vld [vmem:[%s3] sm:$0xf]
  %v222 = vld [vmem:[%s3 + $0x4] sm:$0xf]
  %v223 = vld [vmem:[%s3 + $0x8] sm:$0xf]
  %v224 = vld [vmem:[%s3 + $0xc] sm:$0xf]
  %v225 = vld [vmem:[%s3 + $0x10] sm:$0xf]
  %v226 = vld [vmem:[%s3 + $0x14] sm:$0xf]
  %v227 = vld [vmem:[%s3 + $0x18] sm:$0xf]
  %v228 = vld [vmem:[%s3 + $0x1c] sm:$0xf]
  %v229 = vld [vmem:[%s3 + $0x20] sm:$0xf]
  %v230 = vld [vmem:[%s3 + $0x24] sm:$0xf]
  %v231 = vld [vmem:[%s3 + $0x28] sm:$0xf]
  %v232 = vld [vmem:[%s3 + $0x2c] sm:$0xf]
  %v233 = vld [vmem:[%s3 + $0x30] sm:$0xf]
  %v234 = vld [vmem:[%s3 + $0x34] sm:$0xf]
  %v235 = vld [vmem:[%s3 + $0x38] sm:$0xf]
  %v236 = vld [vmem:[%s3 + $0x3c] sm:$0xf]
  %v237 = vld [vmem:[%s4] sm:$0x1]
  %v239 = vlaneseq
  %v240 = vshrl.u32 %v239, 7
  %v241 = vsub.s32 0, %v240
  %v242 = vrot.slane %v237, %v241
  %v260 = vunpack.c.l.b16 %v221
  %v261 = vunpack.c.l.b16 %v222
  %v262 = vunpack.c.l.b16 %v223
  %v263 = vunpack.c.l.b16 %v224
  %v264 = vunpack.c.l.b16 %v225
  %v265 = vunpack.c.l.b16 %v226
  %v266 = vunpack.c.l.b16 %v227
  %v267 = vunpack.c.l.b16 %v228
  %v268 = vunpack.c.l.b16 %v229
  %v269 = vunpack.c.l.b16 %v230
  %v270 = vunpack.c.l.b16 %v231
  %v271 = vunpack.c.l.b16 %v232
  %v272 = vunpack.c.l.b16 %v233
  %v273 = vunpack.c.l.b16 %v234
  %v274 = vunpack.c.l.b16 %v235
  %v275 = vunpack.c.l.b16 %v236
  %v276 = vpack.c.b16 %v261, %v260
  %v277 = vpack.c.b16 %v263, %v262
  %v278 = vpack.c.b16 %v265, %v264
  %v279 = vpack.c.b16 %v267, %v266
  %v280 = vpack.c.b16 %v269, %v268
  %v281 = vpack.c.b16 %v271, %v270
  %v282 = vpack.c.b16 %v273, %v272
  %v283 = vpack.c.b16 %v275, %v274
  %292 = vmatprep.subr.bf16.mxu0 0
  %293 = vmatpush1.bf16.msra.mxu0 %v283
  %294 = vmatprep.subr.bf16.mxu0 0
  %295 = vmatpush1.bf16.msra.mxu0 %v282
  %296 = vmatprep.subr.bf16.mxu0 0
  %297 = vmatpush1.bf16.msra.mxu0 %v281
  %298 = vmatprep.subr.bf16.mxu0 0
  %299 = vmatpush1.bf16.msra.mxu0 %v280
  %300 = vmatprep.subr.bf16.mxu0 0
  %301 = vmatpush1.bf16.msra.mxu0 %v279
  %302 = vmatprep.subr.bf16.mxu0 0
  %303 = vmatpush1.bf16.msra.mxu0 %v278
  %304 = vmatprep.subr.bf16.mxu0 0
  %305 = vmatpush1.bf16.msra.mxu0 %v277
  %306 = vmatprep.subr.bf16.mxu0 0
  %307 = vmatpush1.bf16.msra.mxu0 %v276
  %308 = vmatprep.subr.bf16.mxu0 0
  %309 = vmatpush2.bf16.msra.mxu0 0
  %310 = vmatprep.subr.bf16.mxu0 0
  %311 = vmatpush2.bf16.msra.mxu0 0
  %312 = vmatprep.subr.bf16.mxu0 0
  %313 = vmatpush2.bf16.msra.mxu0 0
  %314 = vmatprep.subr.bf16.mxu0 0
  %315 = vmatpush2.bf16.msra.mxu0 0
  %316 = vmatprep.subr.bf16.mxu0 0
  %317 = vmatpush2.bf16.msra.mxu0 0
  %318 = vmatprep.subr.bf16.mxu0 0
  %319 = vmatpush2.bf16.msra.mxu0 0
  %320 = vmatprep.subr.bf16.mxu0 0
  %321 = vmatpush2.bf16.msra.mxu0 0
  %322 = vmatprep.subr.bf16.mxu0 0
  %323 = vmatpush2.bf16.msra.mxu0 0
  %324 = vmatprep.mubr.bf16.mxu0 0
  %325 = vmatmul.mubr.bf16.gmra.mxu0 %v213
  %v326 = vpop.f32.mrf.mxu0
  %v327 = vadd.f32 %v242, %v326
  %v328 = vpop.f32.mrf.mxu0
  %v329 = vpop.f32.mrf.mxu0
  %v330 = vadd.f32 %v242, %v329
  %v331 = vpop.f32.mrf.mxu0
  %332 = vmatprep.mubr.bf16.mxu0 0
  %333 = vmatmul.mubr.bf16.gmra.mxu0 %v214
  %v334 = vpop.f32.mrf.mxu0
  %v335 = vadd.f32 %v242, %v334
  %v336 = vpop.f32.mrf.mxu0
  %v337 = vpop.f32.mrf.mxu0
  %v338 = vadd.f32 %v242, %v337
  %v339 = vpop.f32.mrf.mxu0
  %340 = vmatprep.mubr.bf16.mxu0 0
  %341 = vmatmul.mubr.bf16.gmra.mxu0 %v215
  %v342 = vpop.f32.mrf.mxu0
  %v343 = vadd.f32 %v242, %v342
  %v344 = vpop.f32.mrf.mxu0
  %v345 = vpop.f32.mrf.mxu0
  %v346 = vadd.f32 %v242, %v345
  %v347 = vpop.f32.mrf.mxu0
  %348 = vmatprep.mubr.bf16.mxu0 0
  %349 = vmatmul.mubr.bf16.gmra.mxu0 %v216
  %v350 = vpop.f32.mrf.mxu0
  %v351 = vadd.f32 %v242, %v350
  %v352 = vpop.f32.mrf.mxu0
  %v353 = vpop.f32.mrf.mxu0
  %v354 = vadd.f32 %v242, %v353
  %v355 = vpop.f32.mrf.mxu0
  %356 = vmatprep.mubr.bf16.mxu0 0
  %357 = vmatmul.mubr.bf16.gmra.mxu0 %v217
  %v358 = vpop.f32.mrf.mxu0
  %v359 = vadd.f32 %v242, %v358
  %v360 = vpop.f32.mrf.mxu0
  %v361 = vpop.f32.mrf.mxu0
  %v362 = vadd.f32 %v242, %v361
  %v363 = vpop.f32.mrf.mxu0
  %364 = vmatprep.mubr.bf16.mxu0 0
  %365 = vmatmul.mubr.bf16.gmra.mxu0 %v218
  %v366 = vpop.f32.mrf.mxu0
  %v367 = vadd.f32 %v242, %v366
  %v368 = vpop.f32.mrf.mxu0
  %v369 = vpop.f32.mrf.mxu0
  %v370 = vadd.f32 %v242, %v369
  %v371 = vpop.f32.mrf.mxu0
  %372 = vmatprep.mubr.bf16.mxu0 0
  %373 = vmatmul.mubr.bf16.gmra.mxu0 %v219
  %v374 = vpop.f32.mrf.mxu0
  %v375 = vadd.f32 %v242, %v374
  %v376 = vpop.f32.mrf.mxu0
  %v377 = vpop.f32.mrf.mxu0
  %v378 = vadd.f32 %v242, %v377
  %v379 = vpop.f32.mrf.mxu0
  %380 = vmatprep.mubr.bf16.mxu0 0
  %381 = vmatmul.mubr.bf16.gmra.mxu0 %v220
  %v382 = vpop.f32.mrf.mxu0
  %v383 = vadd.f32 %v242, %v382
  %v384 = vpop.f32.mrf.mxu0
  %v385 = vpop.f32.mrf.mxu0
  %v386 = vadd.f32 %v242, %v385
  %v387 = vpop.f32.mrf.mxu0
  %388 = vdwg.mxu0
  %v389 = vlaneseq
  %v390 = vand.u32 %v389, 127
  %vm391 = vcmp.lt.s32.totalorder %v390, 8
  %v392 = vsel %vm391, %v327, -inf
  %v393 = vsel %vm391, %v330, -inf
  %v394 = vsel %vm391, %v335, -inf
  %v395 = vsel %vm391, %v338, -inf
  %v396 = vsel %vm391, %v343, -inf
  %v397 = vsel %vm391, %v346, -inf
  %v398 = vsel %vm391, %v351, -inf
  %v399 = vsel %vm391, %v354, -inf
  %v400 = vsel %vm391, %v359, -inf
  %v401 = vsel %vm391, %v362, -inf
  %v402 = vsel %vm391, %v367, -inf
  %v403 = vsel %vm391, %v370, -inf
  %v404 = vsel %vm391, %v375, -inf
  %v405 = vsel %vm391, %v378, -inf
  %v406 = vsel %vm391, %v383, -inf
  %v407 = vsel %vm391, %v386, -inf
  %408 = vmax.xlane.f32.xlu0 %v392
  %v409 = vpop.xlane.xlu0 %408
  %410 = vmax.xlane.f32.xlu0 %v393
  %v411 = vpop.xlane.xlu0 %410
  %412 = vmax.xlane.f32.xlu0 %v394
  %v413 = vpop.xlane.xlu0 %412
  %414 = vmax.xlane.f32.xlu0 %v395
  %v415 = vpop.xlane.xlu0 %414
  %416 = vmax.xlane.f32.xlu0 %v396
  %v417 = vpop.xlane.xlu0 %416
  %418 = vmax.xlane.f32.xlu0 %v397
  %v419 = vpop.xlane.xlu0 %418
  %420 = vmax.xlane.f32.xlu0 %v398
  %v421 = vpop.xlane.xlu0 %420
  %422 = vmax.xlane.f32.xlu0 %v399
  %v423 = vpop.xlane.xlu0 %422
  %424 = vmax.xlane.f32.xlu0 %v400
  %v425 = vpop.xlane.xlu0 %424
  %426 = vmax.xlane.f32.xlu0 %v401
  %v427 = vpop.xlane.xlu0 %426
  %428 = vmax.xlane.f32.xlu0 %v402
  %v429 = vpop.xlane.xlu0 %428
  %430 = vmax.xlane.f32.xlu0 %v403
  %v431 = vpop.xlane.xlu0 %430
  %432 = vmax.xlane.f32.xlu0 %v404
  %v433 = vpop.xlane.xlu0 %432
  %434 = vmax.xlane.f32.xlu0 %v405
  %v435 = vpop.xlane.xlu0 %434
  %436 = vmax.xlane.f32.xlu0 %v406
  %v437 = vpop.xlane.xlu0 %436
  %438 = vmax.xlane.f32.xlu0 %v407
  %v439 = vpop.xlane.xlu0 %438
  %v440 = vsub.f32 %v392, %v409
  %v441 = vsub.f32 %v393, %v411
  %v442 = vsub.f32 %v394, %v413
  %v443 = vsub.f32 %v395, %v415
  %v444 = vsub.f32 %v396, %v417
  %v445 = vsub.f32 %v397, %v419
  %v446 = vsub.f32 %v398, %v421
  %v447 = vsub.f32 %v399, %v423
  %v448 = vsub.f32 %v400, %v425
  %v449 = vsub.f32 %v401, %v427
  %v450 = vsub.f32 %v402, %v429
  %v451 = vsub.f32 %v403, %v431
  %v452 = vsub.f32 %v404, %v433
  %v453 = vsub.f32 %v405, %v435
  %v454 = vsub.f32 %v406, %v437
  %v455 = vsub.f32 %v407, %v439
  %v456 = vmul.f32 %v440, 1.442695
  %v457 = vpow.pop %v456
  %v458 = vmul.f32 %v441, 1.442695
  %v459 = vpow.pop %v458
  %v460 = vmul.f32 %v442, 1.442695
  %v461 = vpow.pop %v460
  %v462 = vmul.f32 %v443, 1.442695
  %v463 = vpow.pop %v462
  %v464 = vmul.f32 %v444, 1.442695
  %v465 = vpow.pop %v464
  %v466 = vmul.f32 %v445, 1.442695
  %v467 = vpow.pop %v466
  %v468 = vmul.f32 %v446, 1.442695
  %v469 = vpow.pop %v468
  %v470 = vmul.f32 %v447, 1.442695
  %v471 = vpow.pop %v470
  %v472 = vmul.f32 %v448, 1.442695
  %v473 = vpow.pop %v472
  %v474 = vmul.f32 %v449, 1.442695
  %v475 = vpow.pop %v474
  %v476 = vmul.f32 %v450, 1.442695
  %v477 = vpow.pop %v476
  %v478 = vmul.f32 %v451, 1.442695
  %v479 = vpow.pop %v478
  %v480 = vmul.f32 %v452, 1.442695
  %v481 = vpow.pop %v480
  %v482 = vmul.f32 %v453, 1.442695
  %v483 = vpow.pop %v482
  %v484 = vmul.f32 %v454, 1.442695
  %v485 = vpow.pop %v484
  %v486 = vmul.f32 %v455, 1.442695
  %v487 = vpow.pop %v486
  %488 = vadd.xlane.f32.xlu0 %v457
  %v489 = vpop.xlane.xlu0 %488
  %490 = vadd.xlane.f32.xlu0 %v459
  %v491 = vpop.xlane.xlu0 %490
  %492 = vadd.xlane.f32.xlu0 %v461
  %v493 = vpop.xlane.xlu0 %492
  %494 = vadd.xlane.f32.xlu0 %v463
  %v495 = vpop.xlane.xlu0 %494
  %496 = vadd.xlane.f32.xlu0 %v465
  %v497 = vpop.xlane.xlu0 %496
  %498 = vadd.xlane.f32.xlu0 %v467
  %v499 = vpop.xlane.xlu0 %498
  %500 = vadd.xlane.f32.xlu0 %v469
  %v501 = vpop.xlane.xlu0 %500
  %502 = vadd.xlane.f32.xlu0 %v471
  %v503 = vpop.xlane.xlu0 %502
  %504 = vadd.xlane.f32.xlu0 %v473
  %v505 = vpop.xlane.xlu0 %504
  %506 = vadd.xlane.f32.xlu0 %v475
  %v507 = vpop.xlane.xlu0 %506
  %508 = vadd.xlane.f32.xlu0 %v477
  %v509 = vpop.xlane.xlu0 %508
  %510 = vadd.xlane.f32.xlu0 %v479
  %v511 = vpop.xlane.xlu0 %510
  %512 = vadd.xlane.f32.xlu0 %v481
  %v513 = vpop.xlane.xlu0 %512
  %514 = vadd.xlane.f32.xlu0 %v483
  %v515 = vpop.xlane.xlu0 %514
  %516 = vadd.xlane.f32.xlu0 %v485
  %v517 = vpop.xlane.xlu0 %516
  %518 = vadd.xlane.f32.xlu0 %v487
  %v519 = vpop.xlane.xlu0 %518
  %v520 = vlog2.pop %v489
  %v521 = vmul.f32 %v520, 0.6931472
  %v522 = vlog2.pop %v491
  %v523 = vmul.f32 %v522, 0.6931472
  %v524 = vlog2.pop %v493
  %v525 = vmul.f32 %v524, 0.6931472
  %v526 = vlog2.pop %v495
  %v527 = vmul.f32 %v526, 0.6931472
  %v528 = vlog2.pop %v497
  %v529 = vmul.f32 %v528, 0.6931472
  %v530 = vlog2.pop %v499
  %v531 = vmul.f32 %v530, 0.6931472
  %v532 = vlog2.pop %v501
  %v533 = vmul.f32 %v532, 0.6931472
  %v534 = vlog2.pop %v503
  %v535 = vmul.f32 %v534, 0.6931472
  %v536 = vlog2.pop %v505
  %v537 = vmul.f32 %v536, 0.6931472
  %v538 = vlog2.pop %v507
  %v539 = vmul.f32 %v538, 0.6931472
  %v540 = vlog2.pop %v509
  %v541 = vmul.f32 %v540, 0.6931472
  %v542 = vlog2.pop %v511
  %v543 = vmul.f32 %v542, 0.6931472
  %v544 = vlog2.pop %v513
  %v545 = vmul.f32 %v544, 0.6931472
  %v546 = vlog2.pop %v515
  %v547 = vmul.f32 %v546, 0.6931472
  %v548 = vlog2.pop %v517
  %v549 = vmul.f32 %v548, 0.6931472
  %v550 = vlog2.pop %v519
  %v551 = vmul.f32 %v550, 0.6931472
  %v552 = vsub.f32 %v327, %v409
  %v553 = vsub.f32 %v330, %v411
  %v554 = vsub.f32 %v335, %v413
  %v555 = vsub.f32 %v338, %v415
  %v556 = vsub.f32 %v343, %v417
  %v557 = vsub.f32 %v346, %v419
  %v558 = vsub.f32 %v351, %v421
  %v559 = vsub.f32 %v354, %v423
  %v560 = vsub.f32 %v359, %v425
  %v561 = vsub.f32 %v362, %v427
  %v562 = vsub.f32 %v367, %v429
  %v563 = vsub.f32 %v370, %v431
  %v564 = vsub.f32 %v375, %v433
  %v565 = vsub.f32 %v378, %v435
  %v566 = vsub.f32 %v383, %v437
  %v567 = vsub.f32 %v386, %v439
  %v568 = vsub.f32 %v552, %v521
  %v569 = vsub.f32 %v553, %v523
  %v570 = vsub.f32 %v554, %v525
  %v571 = vsub.f32 %v555, %v527
  %v572 = vsub.f32 %v556, %v529
  %v573 = vsub.f32 %v557, %v531
  %v574 = vsub.f32 %v558, %v533
  %v575 = vsub.f32 %v559, %v535
  %v576 = vsub.f32 %v560, %v537
  %v577 = vsub.f32 %v561, %v539
  %v578 = vsub.f32 %v562, %v541
  %v579 = vsub.f32 %v563, %v543
  %v580 = vsub.f32 %v564, %v545
  %v581 = vsub.f32 %v565, %v547
  %v582 = vsub.f32 %v566, %v549
  %v583 = vsub.f32 %v567, %v551
  %v584 = vsel %vm391, %v568, 0.0
  %v585 = vsel %vm391, %v569, 0.0
  %v586 = vsel %vm391, %v570, 0.0
  %v587 = vsel %vm391, %v571, 0.0
  %v588 = vsel %vm391, %v572, 0.0
  %v589 = vsel %vm391, %v573, 0.0
  %v590 = vsel %vm391, %v574, 0.0
  %v591 = vsel %vm391, %v575, 0.0
  %v592 = vsel %vm391, %v576, 0.0
  %v593 = vsel %vm391, %v577, 0.0
  %v594 = vsel %vm391, %v578, 0.0
  %v595 = vsel %vm391, %v579, 0.0
  %v596 = vsel %vm391, %v580, 0.0
  %v597 = vsel %vm391, %v581, 0.0
  %v598 = vsel %vm391, %v582, 0.0
  %v599 = vsel %vm391, %v583, 0.0
  %600 = vst [vmem:[%s5] sm:$0xff] %v584
  %601 = vst [vmem:[%s5 + $0x8] sm:$0xff] %v585
  %602 = vst [vmem:[%s5 + $0x10] sm:$0xff] %v586
  %603 = vst [vmem:[%s5 + $0x18] sm:$0xff] %v587
  %604 = vst [vmem:[%s5 + $0x20] sm:$0xff] %v588
  %605 = vst [vmem:[%s5 + $0x28] sm:$0xff] %v589
  %606 = vst [vmem:[%s5 + $0x30] sm:$0xff] %v590
  %607 = vst [vmem:[%s5 + $0x38] sm:$0xff] %v591
  %608 = vst [vmem:[%s5 + $0x40] sm:$0xff] %v592
  %609 = vst [vmem:[%s5 + $0x48] sm:$0xff] %v593
  %610 = vst [vmem:[%s5 + $0x50] sm:$0xff] %v594
  %611 = vst [vmem:[%s5 + $0x58] sm:$0xff] %v595
  %612 = vst [vmem:[%s5 + $0x60] sm:$0xff] %v596
  %613 = vst [vmem:[%s5 + $0x68] sm:$0xff] %v597
  %614 = vst [vmem:[%s5 + $0x70] sm:$0xff] %v598
  %615 = vst [vmem:[%s5 + $0x78] sm:$0xff] %v599
  // Predicated region
  $region22: #{gnn_stack_forward.13} parent=0 // pred_check
    _
  $region23: #{gnn_stack_forward.13} parent=0 // pred_check_branch
    %617 = sbr.rel (0) target = $region25
  $region24: #{gnn_stack_forward.13} parent=0 // pred_region
    _
  $region25: #{gnn_stack_forward.13} parent=0 // pred_fallthru
    _
  // Predicated region
  $region26: #{gnn_stack_forward.13} parent=0 // pred_check
    _
  $region27: #{gnn_stack_forward.13} parent=0 // pred_check_branch
    %619 = sbr.rel (0) target = $region29
  $region28: #{gnn_stack_forward.13} parent=0 // pred_region
    _
  $region29: #{gnn_stack_forward.13} parent=0 // pred_fallthru
    _

// kernel: gnn_stack_forward.8
$region0: #{gnn_stack_forward.8}
  #allocation0 [shape = 'u32[]', space=smem, size = 0x4, offset = 0x4, fixed_abs, tag = 'smem constant byte address 0x4 - core index']
  #allocation1 [shape = 'u32[144,128]{1,0:T(1,128)}', space=vmem, size = 0x12000, scoped, tag = 'internal scratch']
  %s0 = inlined_call_operand.vmem [shape: bf16[128,128], index: 0, kind: input, shape index: {}]
  %s1 = inlined_call_operand.vmem [shape: bf16[128,128], index: 1, kind: input, shape index: {}]
  %s2 = inlined_call_operand.vmem [shape: f32[1,128], index: 2, kind: input, shape index: {}]
  %s3 = inlined_call_operand.vmem [shape: f32[1,128], index: 3, kind: input, shape index: {}]
  %s4 = inlined_call_operand.vmem [shape: f32[1,128], index: 4, kind: input, shape index: {}]
  %s5 = inlined_call_operand.vmem [shape: f32[128,128], index: 5, kind: output, shape index: {}]
  %s6 = sld [smem:[#allocation0]]
  $region38: #{gnn_stack_forward.8} parent=0
    _
  %s8 = ssub.s32 1, %s6
  %s9 = scalar_select 0, %s8, %s6
  // Predicated region
  $region2: #{gnn_stack_forward.8} parent=0 // pred_check
    _
  $region3: #{gnn_stack_forward.8} parent=0 // pred_check_branch
    %11 = sbr.rel (0) target = $region5
  $region4: #{gnn_stack_forward.8} parent=0 // pred_region
    _
  $region5: #{gnn_stack_forward.8} parent=0 // pred_fallthru
    _
  // Predicated region
  $region6: #{gnn_stack_forward.8} parent=0 // pred_check
    _
  $region7: #{gnn_stack_forward.8} parent=0 // pred_check_branch
    %13 = sbr.rel (0) target = $region9
  $region8: #{gnn_stack_forward.8} parent=0 // pred_region
    _
  $region9: #{gnn_stack_forward.8} parent=0 // pred_fallthru
    _
  // Predicated region
  $region10: #{gnn_stack_forward.8} parent=0 // pred_check
    _
  $region11: #{gnn_stack_forward.8} parent=0 // pred_check_branch
    %15 = sbr.rel (0) target = $region13
  $region12: #{gnn_stack_forward.8} parent=0 // pred_region
    _
  $region13: #{gnn_stack_forward.8} parent=0 // pred_fallthru
    _
  // Predicated region
  $region14: #{gnn_stack_forward.8} parent=0 // pred_check
    _
  $region15: #{gnn_stack_forward.8} parent=0 // pred_check_branch
    %17 = sbr.rel (0) target = $region17
  $region16: #{gnn_stack_forward.8} parent=0 // pred_region
    _
  $region17: #{gnn_stack_forward.8} parent=0 // pred_fallthru
    _
  // Predicated region
  $region18: #{gnn_stack_forward.8} parent=0 // pred_check
    _
  $region19: #{gnn_stack_forward.8} parent=0 // pred_check_branch
    %19 = sbr.rel (0) target = $region21
  $region20: #{gnn_stack_forward.8} parent=0 // pred_region
    _
  $region21: #{gnn_stack_forward.8} parent=0 // pred_fallthru
    _
  %p21 = scmp.eq.s32.totalorder 0, 0
  // Predicated region
  $region22: #{gnn_stack_forward.8} parent=0 // pred_check
    %p22 = pneg %p21
  $region23: #{gnn_stack_forward.8} parent=0 // pred_check_branch
    %24 = sbr.rel (%p22) target = $region25
  $region24: #{gnn_stack_forward.8} parent=0 // pred_region
    %25 = vst [vmem:[%s5] sm:$0xff] 0.0
    %26 = vst [vmem:[%s5 + $0x8] sm:$0xff] 0.0
    %27 = vst [vmem:[%s5 + $0x10] sm:$0xff] 0.0
    %28 = vst [vmem:[%s5 + $0x18] sm:$0xff] 0.0
    %29 = vst [vmem:[%s5 + $0x20] sm:$0xff] 0.0
    %30 = vst [vmem:[%s5 + $0x28] sm:$0xff] 0.0
    %31 = vst [vmem:[%s5 + $0x30] sm:$0xff] 0.0
    %32 = vst [vmem:[%s5 + $0x38] sm:$0xff] 0.0
    %33 = vst [vmem:[%s5 + $0x40] sm:$0xff] 0.0
    %34 = vst [vmem:[%s5 + $0x48] sm:$0xff] 0.0
    %35 = vst [vmem:[%s5 + $0x50] sm:$0xff] 0.0
    %36 = vst [vmem:[%s5 + $0x58] sm:$0xff] 0.0
    %37 = vst [vmem:[%s5 + $0x60] sm:$0xff] 0.0
    %38 = vst [vmem:[%s5 + $0x68] sm:$0xff] 0.0
    %39 = vst [vmem:[%s5 + $0x70] sm:$0xff] 0.0
    %40 = vst [vmem:[%s5 + $0x78] sm:$0xff] 0.0
  $region25: #{gnn_stack_forward.8} parent=0 // pred_fallthru
    _
  %s41 = smul.u32 0, 128
  %v42 = vld [vmem:[%s5] sm:$0xff]
  %v43 = vld [vmem:[%s5 + $0x8] sm:$0xff]
  %v44 = vld [vmem:[%s5 + $0x10] sm:$0xff]
  %v45 = vld [vmem:[%s5 + $0x18] sm:$0xff]
  %v46 = vld [vmem:[%s5 + $0x20] sm:$0xff]
  %v47 = vld [vmem:[%s5 + $0x28] sm:$0xff]
  %v48 = vld [vmem:[%s5 + $0x30] sm:$0xff]
  %v49 = vld [vmem:[%s5 + $0x38] sm:$0xff]
  %v50 = vld [vmem:[%s5 + $0x40] sm:$0xff]
  %v51 = vld [vmem:[%s5 + $0x48] sm:$0xff]
  %v52 = vld [vmem:[%s5 + $0x50] sm:$0xff]
  %v53 = vld [vmem:[%s5 + $0x58] sm:$0xff]
  %v54 = vld [vmem:[%s5 + $0x60] sm:$0xff]
  %v55 = vld [vmem:[%s5 + $0x68] sm:$0xff]
  %v56 = vld [vmem:[%s5 + $0x70] sm:$0xff]
  %v57 = vld [vmem:[%s5 + $0x78] sm:$0xff]
  %v58 = vld [vmem:[%s0] sm:$0xf]
  %v59 = vld [vmem:[%s0 + $0x4] sm:$0xf]
  %v60 = vld [vmem:[%s0 + $0x8] sm:$0xf]
  %v61 = vld [vmem:[%s0 + $0xc] sm:$0xf]
  %v62 = vld [vmem:[%s0 + $0x10] sm:$0xf]
  %v63 = vld [vmem:[%s0 + $0x14] sm:$0xf]
  %v64 = vld [vmem:[%s0 + $0x18] sm:$0xf]
  %v65 = vld [vmem:[%s0 + $0x1c] sm:$0xf]
  %v66 = vld [vmem:[%s0 + $0x20] sm:$0xf]
  %v67 = vld [vmem:[%s0 + $0x24] sm:$0xf]
  %v68 = vld [vmem:[%s0 + $0x28] sm:$0xf]
  %v69 = vld [vmem:[%s0 + $0x2c] sm:$0xf]
  %v70 = vld [vmem:[%s0 + $0x30] sm:$0xf]
  %v71 = vld [vmem:[%s0 + $0x34] sm:$0xf]
  %v72 = vld [vmem:[%s0 + $0x38] sm:$0xf]
  %v73 = vld [vmem:[%s0 + $0x3c] sm:$0xf]
  %s74 = sshra.s32 %s41, 3
  %s75 = sand.u32 %s41, 7
  %s76 = smul.addr %s74, 4
  %s77 = scalar_lea.vmem %s1, %s76
  %v78 = vld [vmem:[%s77] sm:$0xf]
  %v79 = vld [vmem:[%s77 + $0x4] sm:$0xf]
  %v80 = vld [vmem:[%s77 + $0x8] sm:$0xf]
  %v81 = vld [vmem:[%s77 + $0xc] sm:$0xf]
  %v82 = vld [vmem:[%s77 + $0x10] sm:$0xf]
  %v83 = vld [vmem:[%s77 + $0x14] sm:$0xf]
  %v84 = vld [vmem:[%s77 + $0x18] sm:$0xf]
  %v85 = vld [vmem:[%s77 + $0x1c] sm:$0xf]
  %v86 = vld [vmem:[%s77 + $0x20] sm:$0xf]
  %v87 = vld [vmem:[%s77 + $0x24] sm:$0xf]
  %v88 = vld [vmem:[%s77 + $0x28] sm:$0xf]
  %v89 = vld [vmem:[%s77 + $0x2c] sm:$0xf]
  %v90 = vld [vmem:[%s77 + $0x30] sm:$0xf]
  %v91 = vld [vmem:[%s77 + $0x34] sm:$0xf]
  %v92 = vld [vmem:[%s77 + $0x38] sm:$0xf]
  %v93 = vld [vmem:[%s77 + $0x3c] sm:$0xf]
  %v110 = vunpack.c.l.b16 %v58
  %v111 = vunpack.c.l.b16 %v59
  %v112 = vunpack.c.l.b16 %v60
  %v113 = vunpack.c.l.b16 %v61
  %v114 = vunpack.c.l.b16 %v62
  %v115 = vunpack.c.l.b16 %v63
  %v116 = vunpack.c.l.b16 %v64
  %v117 = vunpack.c.l.b16 %v65
  %v118 = vunpack.c.l.b16 %v66
  %v119 = vunpack.c.l.b16 %v67
  %v120 = vunpack.c.l.b16 %v68
  %v121 = vunpack.c.l.b16 %v69
  %v122 = vunpack.c.l.b16 %v70
  %v123 = vunpack.c.l.b16 %v71
  %v124 = vunpack.c.l.b16 %v72
  %v125 = vunpack.c.l.b16 %v73
  %v126 = vpack.c.b16 %v111, %v110
  %v127 = vpack.c.b16 %v113, %v112
  %v128 = vpack.c.b16 %v115, %v114
  %v129 = vpack.c.b16 %v117, %v116
  %v130 = vpack.c.b16 %v119, %v118
  %v131 = vpack.c.b16 %v121, %v120
  %v132 = vpack.c.b16 %v123, %v122
  %v133 = vpack.c.b16 %v125, %v124
  %v158 = vunpack.c.l.b16 %v78
  %v159 = vunpack.c.l.b16 %v79
  %v160 = vunpack.c.l.b16 %v80
  %v161 = vunpack.c.l.b16 %v81
  %v162 = vunpack.c.l.b16 %v82
  %v163 = vunpack.c.l.b16 %v83
  %v164 = vunpack.c.l.b16 %v84
  %v165 = vunpack.c.l.b16 %v85
  %v166 = vunpack.c.l.b16 %v86
  %v167 = vunpack.c.l.b16 %v87
  %v168 = vunpack.c.l.b16 %v88
  %v169 = vunpack.c.l.b16 %v89
  %v170 = vunpack.c.l.b16 %v90
  %v171 = vunpack.c.l.b16 %v91
  %v172 = vunpack.c.l.b16 %v92
  %v173 = vunpack.c.l.b16 %v93
  %v174 = vpack.c.b16 %v159, %v158
  %v175 = vpack.c.b16 %v161, %v160
  %v176 = vpack.c.b16 %v163, %v162
  %v177 = vpack.c.b16 %v165, %v164
  %v178 = vpack.c.b16 %v167, %v166
  %v179 = vpack.c.b16 %v169, %v168
  %v180 = vpack.c.b16 %v171, %v170
  %v181 = vpack.c.b16 %v173, %v172
  %190 = vmatprep.subr.bf16.mxu0 0
  %191 = vmatpush1.bf16.msra.mxu0 %v181
  %192 = vmatprep.subr.bf16.mxu0 0
  %193 = vmatpush1.bf16.msra.mxu0 %v180
  %194 = vmatprep.subr.bf16.mxu0 0
  %195 = vmatpush1.bf16.msra.mxu0 %v179
  %196 = vmatprep.subr.bf16.mxu0 0
  %197 = vmatpush1.bf16.msra.mxu0 %v178
  %198 = vmatprep.subr.bf16.mxu0 0
  %199 = vmatpush1.bf16.msra.mxu0 %v177
  %200 = vmatprep.subr.bf16.mxu0 0
  %201 = vmatpush1.bf16.msra.mxu0 %v176
  %202 = vmatprep.subr.bf16.mxu0 0
  %203 = vmatpush1.bf16.msra.mxu0 %v175
  %204 = vmatprep.subr.bf16.mxu0 0
  %205 = vmatpush1.bf16.msra.mxu0 %v174
  %206 = vmatprep.subr.bf16.mxu0 0
  %207 = vmatpush2.bf16.msra.mxu0 0
  %208 = vmatprep.subr.bf16.mxu0 0
  %209 = vmatpush2.bf16.msra.mxu0 0
  %210 = vmatprep.subr.bf16.mxu0 0
  %211 = vmatpush2.bf16.msra.mxu0 0
  %212 = vmatprep.subr.bf16.mxu0 0
  %213 = vmatpush2.bf16.msra.mxu0 0
  %214 = vmatprep.subr.bf16.mxu0 0
  %215 = vmatpush2.bf16.msra.mxu0 0
  %216 = vmatprep.subr.bf16.mxu0 0
  %217 = vmatpush2.bf16.msra.mxu0 0
  %218 = vmatprep.subr.bf16.mxu0 0
  %219 = vmatpush2.bf16.msra.mxu0 0
  %220 = vmatprep.subr.bf16.mxu0 0
  %221 = vmatpush2.bf16.msra.mxu0 0
  %222 = vmatprep.mubr.bf16.mxu0 0
  %223 = vmatmul.mubr.bf16.gmra.mxu0 %v126
  %v224 = vpop.f32.mrf.mxu0
  %v225 = vadd.f32 0.0, %v224
  %v226 = vpop.f32.mrf.mxu0
  %v227 = vpop.f32.mrf.mxu0
  %v228 = vadd.f32 0.0, %v227
  %v229 = vpop.f32.mrf.mxu0
  %230 = vmatprep.mubr.bf16.mxu0 0
  %231 = vmatmul.mubr.bf16.gmra.mxu0 %v127
  %v232 = vpop.f32.mrf.mxu0
  %v233 = vadd.f32 0.0, %v232
  %v234 = vpop.f32.mrf.mxu0
  %v235 = vpop.f32.mrf.mxu0
  %v236 = vadd.f32 0.0, %v235
  %v237 = vpop.f32.mrf.mxu0
  %238 = vmatprep.mubr.bf16.mxu0 0
  %239 = vmatmul.mubr.bf16.gmra.mxu0 %v128
  %v240 = vpop.f32.mrf.mxu0
  %v241 = vadd.f32 0.0, %v240
  %v242 = vpop.f32.mrf.mxu0
  %v243 = vpop.f32.mrf.mxu0
  %v244 = vadd.f32 0.0, %v243
  %v245 = vpop.f32.mrf.mxu0
  %246 = vmatprep.mubr.bf16.mxu0 0
  %247 = vmatmul.mubr.bf16.gmra.mxu0 %v129
  %v248 = vpop.f32.mrf.mxu0
  %v249 = vadd.f32 0.0, %v248
  %v250 = vpop.f32.mrf.mxu0
  %v251 = vpop.f32.mrf.mxu0
  %v252 = vadd.f32 0.0, %v251
  %v253 = vpop.f32.mrf.mxu0
  %254 = vmatprep.mubr.bf16.mxu0 0
  %255 = vmatmul.mubr.bf16.gmra.mxu0 %v130
  %v256 = vpop.f32.mrf.mxu0
  %v257 = vadd.f32 0.0, %v256
  %v258 = vpop.f32.mrf.mxu0
  %v259 = vpop.f32.mrf.mxu0
  %v260 = vadd.f32 0.0, %v259
  %v261 = vpop.f32.mrf.mxu0
  %262 = vmatprep.mubr.bf16.mxu0 0
  %263 = vmatmul.mubr.bf16.gmra.mxu0 %v131
  %v264 = vpop.f32.mrf.mxu0
  %v265 = vadd.f32 0.0, %v264
  %v266 = vpop.f32.mrf.mxu0
  %v267 = vpop.f32.mrf.mxu0
  %v268 = vadd.f32 0.0, %v267
  %v269 = vpop.f32.mrf.mxu0
  %270 = vmatprep.mubr.bf16.mxu0 0
  %271 = vmatmul.mubr.bf16.gmra.mxu0 %v132
  %v272 = vpop.f32.mrf.mxu0
  %v273 = vadd.f32 0.0, %v272
  %v274 = vpop.f32.mrf.mxu0
  %v275 = vpop.f32.mrf.mxu0
  %v276 = vadd.f32 0.0, %v275
  %v277 = vpop.f32.mrf.mxu0
  %278 = vmatprep.mubr.bf16.mxu0 0
  %279 = vmatmul.mubr.bf16.gmra.mxu0 %v133
  %v280 = vpop.f32.mrf.mxu0
  %v281 = vadd.f32 0.0, %v280
  %v282 = vpop.f32.mrf.mxu0
  %v283 = vpop.f32.mrf.mxu0
  %v284 = vadd.f32 0.0, %v283
  %v285 = vpop.f32.mrf.mxu0
  %286 = vdwg.mxu0
  %v287 = vadd.f32 %v42, %v225
  %v288 = vadd.f32 %v43, %v228
  %v289 = vadd.f32 %v44, %v233
  %v290 = vadd.f32 %v45, %v236
  %v291 = vadd.f32 %v46, %v241
  %v292 = vadd.f32 %v47, %v244
  %v293 = vadd.f32 %v48, %v249
  %v294 = vadd.f32 %v49, %v252
  %v295 = vadd.f32 %v50, %v257
  %v296 = vadd.f32 %v51, %v260
  %v297 = vadd.f32 %v52, %v265
  %v298 = vadd.f32 %v53, %v268
  %v299 = vadd.f32 %v54, %v273
  %v300 = vadd.f32 %v55, %v276
  %v301 = vadd.f32 %v56, %v281
  %v302 = vadd.f32 %v57, %v284
  %303 = vst [vmem:[%s5] sm:$0xff] %v287
  %304 = vst [vmem:[%s5 + $0x8] sm:$0xff] %v288
  %305 = vst [vmem:[%s5 + $0x10] sm:$0xff] %v289
  %306 = vst [vmem:[%s5 + $0x18] sm:$0xff] %v290
  %307 = vst [vmem:[%s5 + $0x20] sm:$0xff] %v291
  %308 = vst [vmem:[%s5 + $0x28] sm:$0xff] %v292
  %309 = vst [vmem:[%s5 + $0x30] sm:$0xff] %v293
  %310 = vst [vmem:[%s5 + $0x38] sm:$0xff] %v294
  %311 = vst [vmem:[%s5 + $0x40] sm:$0xff] %v295
  %312 = vst [vmem:[%s5 + $0x48] sm:$0xff] %v296
  %313 = vst [vmem:[%s5 + $0x50] sm:$0xff] %v297
  %314 = vst [vmem:[%s5 + $0x58] sm:$0xff] %v298
  %315 = vst [vmem:[%s5 + $0x60] sm:$0xff] %v299
  %316 = vst [vmem:[%s5 + $0x68] sm:$0xff] %v300
  %317 = vst [vmem:[%s5 + $0x70] sm:$0xff] %v301
  %318 = vst [vmem:[%s5 + $0x78] sm:$0xff] %v302
  // Predicated region
  $region26: #{gnn_stack_forward.8} parent=0 // pred_check
    %p319 = pneg %p21
  $region27: #{gnn_stack_forward.8} parent=0 // pred_check_branch
    %321 = sbr.rel (%p319) target = $region29
  $region28: #{gnn_stack_forward.8} parent=0 // pred_region
    %v322 = vld [vmem:[%s5] sm:$0xff]
    %v323 = vld [vmem:[%s5 + $0x8] sm:$0xff]
    %v324 = vld [vmem:[%s5 + $0x10] sm:$0xff]
    %v325 = vld [vmem:[%s5 + $0x18] sm:$0xff]
    %v326 = vld [vmem:[%s5 + $0x20] sm:$0xff]
    %v327 = vld [vmem:[%s5 + $0x28] sm:$0xff]
    %v328 = vld [vmem:[%s5 + $0x30] sm:$0xff]
    %v329 = vld [vmem:[%s5 + $0x38] sm:$0xff]
    %v330 = vld [vmem:[%s5 + $0x40] sm:$0xff]
    %v331 = vld [vmem:[%s5 + $0x48] sm:$0xff]
    %v332 = vld [vmem:[%s5 + $0x50] sm:$0xff]
    %v333 = vld [vmem:[%s5 + $0x58] sm:$0xff]
    %v334 = vld [vmem:[%s5 + $0x60] sm:$0xff]
    %v335 = vld [vmem:[%s5 + $0x68] sm:$0xff]
    %v336 = vld [vmem:[%s5 + $0x70] sm:$0xff]
    %v337 = vld [vmem:[%s5 + $0x78] sm:$0xff]
    %v338 = vld [vmem:[%s2] sm:$0x1]
    %v340 = vlaneseq
    %v341 = vshrl.u32 %v340, 7
    %v342 = vsub.s32 0, %v341
    %v343 = vrot.slane %v338, %v342
    %v345 = vadd.f32 %v322, %v343
    %v346 = vadd.f32 %v323, %v343
    %v347 = vadd.f32 %v324, %v343
    %v348 = vadd.f32 %v325, %v343
    %v349 = vadd.f32 %v326, %v343
    %v350 = vadd.f32 %v327, %v343
    %v351 = vadd.f32 %v328, %v343
    %v352 = vadd.f32 %v329, %v343
    %v353 = vadd.f32 %v330, %v343
    %v354 = vadd.f32 %v331, %v343
    %v355 = vadd.f32 %v332, %v343
    %v356 = vadd.f32 %v333, %v343
    %v357 = vadd.f32 %v334, %v343
    %v358 = vadd.f32 %v335, %v343
    %v359 = vadd.f32 %v336, %v343
    %v360 = vadd.f32 %v337, %v343
    %v361 = vmax.f32 %v345, 0.0
    %v362 = vmax.f32 %v346, 0.0
    %v363 = vmax.f32 %v347, 0.0
    %v364 = vmax.f32 %v348, 0.0
    %v365 = vmax.f32 %v349, 0.0
    %v366 = vmax.f32 %v350, 0.0
    %v367 = vmax.f32 %v351, 0.0
    %v368 = vmax.f32 %v352, 0.0
    %v369 = vmax.f32 %v353, 0.0
    %v370 = vmax.f32 %v354, 0.0
    %v371 = vmax.f32 %v355, 0.0
    %v372 = vmax.f32 %v356, 0.0
    %v373 = vmax.f32 %v357, 0.0
    %v374 = vmax.f32 %v358, 0.0
    %v375 = vmax.f32 %v359, 0.0
    %v376 = vmax.f32 %v360, 0.0
    %v377 = vlaneseq
    %v378 = vand.u32 %v377, 127
    %vm379 = vcmp.lt.s32.totalorder %v378, 32
    %380 = vadd.xlane.f32.xlu0 %v361
    %v381 = vpop.xlane.xlu0 %380
    %382 = vadd.xlane.f32.xlu0 %v362
    %v383 = vpop.xlane.xlu0 %382
    %384 = vadd.xlane.f32.xlu0 %v363
    %v385 = vpop.xlane.xlu0 %384
    %386 = vadd.xlane.f32.xlu0 %v364
    %v387 = vpop.xlane.xlu0 %386
    %388 = vadd.xlane.f32.xlu0 %v365
    %v389 = vpop.xlane.xlu0 %388
    %390 = vadd.xlane.f32.xlu0 %v366
    %v391 = vpop.xlane.xlu0 %390
    %392 = vadd.xlane.f32.xlu0 %v367
    %v393 = vpop.xlane.xlu0 %392
    %394 = vadd.xlane.f32.xlu0 %v368
    %v395 = vpop.xlane.xlu0 %394
    %396 = vadd.xlane.f32.xlu0 %v369
    %v397 = vpop.xlane.xlu0 %396
    %398 = vadd.xlane.f32.xlu0 %v370
    %v399 = vpop.xlane.xlu0 %398
    %400 = vadd.xlane.f32.xlu0 %v371
    %v401 = vpop.xlane.xlu0 %400
    %402 = vadd.xlane.f32.xlu0 %v372
    %v403 = vpop.xlane.xlu0 %402
    %404 = vadd.xlane.f32.xlu0 %v373
    %v405 = vpop.xlane.xlu0 %404
    %406 = vadd.xlane.f32.xlu0 %v374
    %v407 = vpop.xlane.xlu0 %406
    %408 = vadd.xlane.f32.xlu0 %v375
    %v409 = vpop.xlane.xlu0 %408
    %410 = vadd.xlane.f32.xlu0 %v376
    %v411 = vpop.xlane.xlu0 %410
    %v412 = vmul.f32 %v381, 0.03125
    %v413 = vmul.f32 %v383, 0.03125
    %v414 = vmul.f32 %v385, 0.03125
    %v415 = vmul.f32 %v387, 0.03125
    %v416 = vmul.f32 %v389, 0.03125
    %v417 = vmul.f32 %v391, 0.03125
    %v418 = vmul.f32 %v393, 0.03125
    %v419 = vmul.f32 %v395, 0.03125
    %v420 = vmul.f32 %v397, 0.03125
    %v421 = vmul.f32 %v399, 0.03125
    %v422 = vmul.f32 %v401, 0.03125
    %v423 = vmul.f32 %v403, 0.03125
    %v424 = vmul.f32 %v405, 0.03125
    %v425 = vmul.f32 %v407, 0.03125
    %v426 = vmul.f32 %v409, 0.03125
    %v427 = vmul.f32 %v411, 0.03125
    %v428 = vsub.f32 %v361, %v412
    %v429 = vsub.f32 %v362, %v413
    %v430 = vsub.f32 %v363, %v414
    %v431 = vsub.f32 %v364, %v415
    %v432 = vsub.f32 %v365, %v416
    %v433 = vsub.f32 %v366, %v417
    %v434 = vsub.f32 %v367, %v418
    %v435 = vsub.f32 %v368, %v419
    %v436 = vsub.f32 %v369, %v420
    %v437 = vsub.f32 %v370, %v421
    %v438 = vsub.f32 %v371, %v422
    %v439 = vsub.f32 %v372, %v423
    %v440 = vsub.f32 %v373, %v424
    %v441 = vsub.f32 %v374, %v425
    %v442 = vsub.f32 %v375, %v426
    %v443 = vsub.f32 %v376, %v427
    %v444 = vmul.f32 %v428, %v428
    %v445 = vmul.f32 %v429, %v429
    %v446 = vmul.f32 %v430, %v430
    %v447 = vmul.f32 %v431, %v431
    %v448 = vmul.f32 %v432, %v432
    %v449 = vmul.f32 %v433, %v433
    %v450 = vmul.f32 %v434, %v434
    %v451 = vmul.f32 %v435, %v435
    %v452 = vmul.f32 %v436, %v436
    %v453 = vmul.f32 %v437, %v437
    %v454 = vmul.f32 %v438, %v438
    %v455 = vmul.f32 %v439, %v439
    %v456 = vmul.f32 %v440, %v440
    %v457 = vmul.f32 %v441, %v441
    %v458 = vmul.f32 %v442, %v442
    %v459 = vmul.f32 %v443, %v443
    %v460 = vsel %vm379, %v444, 0.0
    %v461 = vsel %vm379, %v445, 0.0
    %v462 = vsel %vm379, %v446, 0.0
    %v463 = vsel %vm379, %v447, 0.0
    %v464 = vsel %vm379, %v448, 0.0
    %v465 = vsel %vm379, %v449, 0.0
    %v466 = vsel %vm379, %v450, 0.0
    %v467 = vsel %vm379, %v451, 0.0
    %v468 = vsel %vm379, %v452, 0.0
    %v469 = vsel %vm379, %v453, 0.0
    %v470 = vsel %vm379, %v454, 0.0
    %v471 = vsel %vm379, %v455, 0.0
    %v472 = vsel %vm379, %v456, 0.0
    %v473 = vsel %vm379, %v457, 0.0
    %v474 = vsel %vm379, %v458, 0.0
    %v475 = vsel %vm379, %v459, 0.0
    %476 = vadd.xlane.f32.xlu0 %v460
    %v477 = vpop.xlane.xlu0 %476
    %478 = vadd.xlane.f32.xlu0 %v461
    %v479 = vpop.xlane.xlu0 %478
    %480 = vadd.xlane.f32.xlu0 %v462
    %v481 = vpop.xlane.xlu0 %480
    %482 = vadd.xlane.f32.xlu0 %v463
    %v483 = vpop.xlane.xlu0 %482
    %484 = vadd.xlane.f32.xlu0 %v464
    %v485 = vpop.xlane.xlu0 %484
    %486 = vadd.xlane.f32.xlu0 %v465
    %v487 = vpop.xlane.xlu0 %486
    %488 = vadd.xlane.f32.xlu0 %v466
    %v489 = vpop.xlane.xlu0 %488
    %490 = vadd.xlane.f32.xlu0 %v467
    %v491 = vpop.xlane.xlu0 %490
    %492 = vadd.xlane.f32.xlu0 %v468
    %v493 = vpop.xlane.xlu0 %492
    %494 = vadd.xlane.f32.xlu0 %v469
    %v495 = vpop.xlane.xlu0 %494
    %496 = vadd.xlane.f32.xlu0 %v470
    %v497 = vpop.xlane.xlu0 %496
    %498 = vadd.xlane.f32.xlu0 %v471
    %v499 = vpop.xlane.xlu0 %498
    %500 = vadd.xlane.f32.xlu0 %v472
    %v501 = vpop.xlane.xlu0 %500
    %502 = vadd.xlane.f32.xlu0 %v473
    %v503 = vpop.xlane.xlu0 %502
    %504 = vadd.xlane.f32.xlu0 %v474
    %v505 = vpop.xlane.xlu0 %504
    %506 = vadd.xlane.f32.xlu0 %v475
    %v507 = vpop.xlane.xlu0 %506
    %v508 = vmul.f32 %v477, 0.03125
    %v509 = vmul.f32 %v479, 0.03125
    %v510 = vmul.f32 %v481, 0.03125
    %v511 = vmul.f32 %v483, 0.03125
    %v512 = vmul.f32 %v485, 0.03125
    %v513 = vmul.f32 %v487, 0.03125
    %v514 = vmul.f32 %v489, 0.03125
    %v515 = vmul.f32 %v491, 0.03125
    %v516 = vmul.f32 %v493, 0.03125
    %v517 = vmul.f32 %v495, 0.03125
    %v518 = vmul.f32 %v497, 0.03125
    %v519 = vmul.f32 %v499, 0.03125
    %v520 = vmul.f32 %v501, 0.03125
    %v521 = vmul.f32 %v503, 0.03125
    %v522 = vmul.f32 %v505, 0.03125
    %v523 = vmul.f32 %v507, 0.03125
    %v524 = vadd.f32 %v508, 1e-05
    %v525 = vadd.f32 %v509, 1e-05
    %v526 = vadd.f32 %v510, 1e-05
    %v527 = vadd.f32 %v511, 1e-05
    %v528 = vadd.f32 %v512, 1e-05
    %v529 = vadd.f32 %v513, 1e-05
    %v530 = vadd.f32 %v514, 1e-05
    %v531 = vadd.f32 %v515, 1e-05
    %v532 = vadd.f32 %v516, 1e-05
    %v533 = vadd.f32 %v517, 1e-05
    %v534 = vadd.f32 %v518, 1e-05
    %v535 = vadd.f32 %v519, 1e-05
    %v536 = vadd.f32 %v520, 1e-05
    %v537 = vadd.f32 %v521, 1e-05
    %v538 = vadd.f32 %v522, 1e-05
    %v539 = vadd.f32 %v523, 1e-05
    %v540 = vrsqrt.pop %v524
    %v541 = vrsqrt.pop %v525
    %v542 = vrsqrt.pop %v526
    %v543 = vrsqrt.pop %v527
    %v544 = vrsqrt.pop %v528
    %v545 = vrsqrt.pop %v529
    %v546 = vrsqrt.pop %v530
    %v547 = vrsqrt.pop %v531
    %v548 = vrsqrt.pop %v532
    %v549 = vrsqrt.pop %v533
    %v550 = vrsqrt.pop %v534
    %v551 = vrsqrt.pop %v535
    %v552 = vrsqrt.pop %v536
    %v553 = vrsqrt.pop %v537
    %v554 = vrsqrt.pop %v538
    %v555 = vrsqrt.pop %v539
    %v556 = vmul.f32 %v428, %v540
    %v557 = vmul.f32 %v429, %v541
    %v558 = vmul.f32 %v430, %v542
    %v559 = vmul.f32 %v431, %v543
    %v560 = vmul.f32 %v432, %v544
    %v561 = vmul.f32 %v433, %v545
    %v562 = vmul.f32 %v434, %v546
    %v563 = vmul.f32 %v435, %v547
    %v564 = vmul.f32 %v436, %v548
    %v565 = vmul.f32 %v437, %v549
    %v566 = vmul.f32 %v438, %v550
    %v567 = vmul.f32 %v439, %v551
    %v568 = vmul.f32 %v440, %v552
    %v569 = vmul.f32 %v441, %v553
    %v570 = vmul.f32 %v442, %v554
    %v571 = vmul.f32 %v443, %v555
    %v572 = vld [vmem:[%s3] sm:$0x1]
    %v574 = vlaneseq
    %v575 = vshrl.u32 %v574, 7
    %v576 = vsub.s32 0, %v575
    %v577 = vrot.slane %v572, %v576
    %v579 = vmul.f32 %v556, %v577
    %v580 = vmul.f32 %v557, %v577
    %v581 = vmul.f32 %v558, %v577
    %v582 = vmul.f32 %v559, %v577
    %v583 = vmul.f32 %v560, %v577
    %v584 = vmul.f32 %v561, %v577
    %v585 = vmul.f32 %v562, %v577
    %v586 = vmul.f32 %v563, %v577
    %v587 = vmul.f32 %v564, %v577
    %v588 = vmul.f32 %v565, %v577
    %v589 = vmul.f32 %v566, %v577
    %v590 = vmul.f32 %v567, %v577
    %v591 = vmul.f32 %v568, %v577
    %v592 = vmul.f32 %v569, %v577
    %v593 = vmul.f32 %v570, %v577
    %v594 = vmul.f32 %v571, %v577
    %v595 = vld [vmem:[%s4] sm:$0x1]
    %v597 = vlaneseq
    %v598 = vshrl.u32 %v597, 7
    %v599 = vsub.s32 0, %v598
    %v600 = vrot.slane %v595, %v599
    %v602 = vadd.f32 %v579, %v600
    %v603 = vadd.f32 %v580, %v600
    %v604 = vadd.f32 %v581, %v600
    %v605 = vadd.f32 %v582, %v600
    %v606 = vadd.f32 %v583, %v600
    %v607 = vadd.f32 %v584, %v600
    %v608 = vadd.f32 %v585, %v600
    %v609 = vadd.f32 %v586, %v600
    %v610 = vadd.f32 %v587, %v600
    %v611 = vadd.f32 %v588, %v600
    %v612 = vadd.f32 %v589, %v600
    %v613 = vadd.f32 %v590, %v600
    %v614 = vadd.f32 %v591, %v600
    %v615 = vadd.f32 %v592, %v600
    %v616 = vadd.f32 %v593, %v600
    %v617 = vadd.f32 %v594, %v600
    %618 = vst [vmem:[%s5] sm:$0xff] %v602
    %619 = vst [vmem:[%s5 + $0x8] sm:$0xff] %v603
    %620 = vst [vmem:[%s5 + $0x10] sm:$0xff] %v604
    %621 = vst [vmem:[%s5 + $0x18] sm:$0xff] %v605
    %622 = vst [vmem:[%s5 + $0x20] sm:$0xff] %v606
    %623 = vst [vmem:[%s5 + $0x28] sm:$0xff] %v607
    %624 = vst [vmem:[%s5 + $0x30] sm:$0xff] %v608
    %625 = vst [vmem:[%s5 + $0x38] sm:$0xff] %v609
    %626 = vst [vmem:[%s5 + $0x40] sm:$0xff] %v610
    %627 = vst [vmem:[%s5 + $0x48] sm:$0xff] %v611
    %628 = vst [vmem:[%s5 + $0x50] sm:$0xff] %v612
    %629 = vst [vmem:[%s5 + $0x58] sm:$0xff] %v613
    %630 = vst [vmem:[%s5 + $0x60] sm:$0xff] %v614
    %631 = vst [vmem:[%s5 + $0x68] sm:$0xff] %v615
    %632 = vst [vmem:[%s5 + $0x70] sm:$0xff] %v616
    %633 = vst [vmem:[%s5 + $0x78] sm:$0xff] %v617
  $region29: #{gnn_stack_forward.8} parent=0 // pred_fallthru
    _
  // Predicated region
  $region30: #{gnn_stack_forward.8} parent=0 // pred_check
    _
  $region31: #{gnn_stack_forward.8} parent=0 // pred_check_branch
    %635 = sbr.rel (0) target = $region33
  $region32: #{gnn_stack_forward.8} parent=0 // pred_region
    _
  $region33: #{gnn_stack_forward.8} parent=0 // pred_fallthru
    _
  // Predicated region
  $region34: #{gnn_stack_forward.8} parent=0 // pred_check
    _
  $region35: #{gnn_stack_forward.8} parent=0 // pred_check_branch
    %637 = sbr.rel (0) target = $region37
  $region36: #{gnn_stack_forward.8} parent=0 // pred_region
    _
  $region37: #{gnn_stack_forward.8} parent=0 // pred_fallthru
    _

</llo_original>
